<compile_context>
chip_gen: v6e
topology: v6e:2x2x1
jax: 0.10.0
libtpu: 0.0.40
codegen_flags: <defaults>
</compile_context>

<pallas_src>
import jax
import jax.numpy as jnp
from jax import lax
from jax.experimental import pallas as pl
from jax.experimental.pallas import tpu as pltpu

D_IN, H1, H2, NUM_CLASSES = 28 * 28, 300, 100, 10


def _pad_to(n, m):
    return ((n + m - 1) // m) * m


H1_P = _pad_to(H1, 128)              # 384
H2_P = _pad_to(H2, 128)              # 128
OUT_P = _pad_to(NUM_CLASSES, 128)    # 128

DEFAULT_BLOCK_ROWS = 512             # batch tile; sweep 256-1024 per chip


def _lenet_kernel(x_ref, w1_ref, b1_ref, w2_ref, b2_ref, w3_ref, b3_ref,
                  o_ref):
    """One batch tile: x_ref (TB, 784) -> o_ref (TB, 128) log-probs (f32)."""
    f32 = jnp.float32

    # fc1 + ReLU.  x / w1 may be bf16 (v6e/v7x config); accumulate in f32.
    h1 = jnp.dot(x_ref[...], w1_ref[...], preferred_element_type=f32)
    h1 = jnp.maximum(h1 + b1_ref[...], 0.0)

    # fc2 + ReLU.  Activations stay f32; up-cast the (tiny) weights in VMEM.
    h2 = jnp.dot(h1, w2_ref[...].astype(f32), preferred_element_type=f32)
    h2 = jnp.maximum(h2 + b2_ref[...], 0.0)

    # fc3
    logits = jnp.dot(h2, w3_ref[...].astype(f32), preferred_element_type=f32)
    logits = logits + b3_ref[...]

    # log_softmax over the first NUM_CLASSES lanes only (rest are padding).
    col = lax.broadcasted_iota(jnp.int32, logits.shape, 1)
    valid = col < NUM_CLASSES
    masked = jnp.where(valid, logits, jnp.float32(-1e30))
    m = jnp.max(masked, axis=1, keepdims=True)
    e = jnp.where(valid, jnp.exp(logits - m), 0.0)
    lse = m + jnp.log(jnp.sum(e, axis=1, keepdims=True))
    o_ref[...] = logits - lse


def prepare_params(params, compute_dtype=jnp.float32):
    """One-time padding of weights/biases to lane-dense shapes.

    Weights are stored in `compute_dtype` (use jnp.bfloat16 on v6e/v7x for
    native-MXU operands and halved weight bytes); biases stay f32.
    """
    w1 = jnp.zeros((D_IN, H1_P), jnp.float32).at[:, :H1].set(params["w1"])
    b1 = jnp.zeros((1, H1_P), jnp.float32).at[0, :H1].set(params["b1"])
    w2 = jnp.zeros((H1_P, H2_P), jnp.float32).at[:H1, :H2].set(params["w2"])
    b2 = jnp.zeros((1, H2_P), jnp.float32).at[0, :H2].set(params["b2"])
    w3 = jnp.zeros((H2_P, OUT_P), jnp.float32).at[:H2, :NUM_CLASSES].set(params["w3"])
    b3 = jnp.zeros((1, OUT_P), jnp.float32).at[0, :NUM_CLASSES].set(params["b3"])
    return {
        "w1": w1.astype(compute_dtype),
        "w2": w2.astype(compute_dtype),
        "w3": w3.astype(compute_dtype),
        "b1": b1, "b2": b2, "b3": b3,
    }


def lenet_forward(x, pparams, *, block_rows=DEFAULT_BLOCK_ROWS):
    """x: (B, 1, 28, 28) or (B, 784).  pparams: output of prepare_params.

    Returns (B, 10) float32 log-probabilities.
    """
    compute_dtype = pparams["w1"].dtype
    B = x.shape[0]
    x2 = x.reshape(B, -1).astype(compute_dtype)          # (B, 784), no lane pad

    # Batch tile: sublane-aligned (16 covers bf16 packing too), capped by the
    # (padded) batch.  On v7x pick block_rows so the grid has >= 2 tiles to
    # feed both TensorCores.
    tb = min(block_rows, _pad_to(B, 16))
    Bp = _pad_to(B, tb)
    if Bp != B:                                          # ragged tail only
        x2 = jnp.pad(x2, ((0, Bp - B), (0, 0)))

    grid = (Bp // tb,)
    out_padded = pl.pallas_call(
        _lenet_kernel,
        out_shape=jax.ShapeDtypeStruct((Bp, OUT_P), jnp.float32),
        grid=grid,
        in_specs=[
            pl.BlockSpec((tb, D_IN), lambda i: (i, 0)),     # x tile (784 lanes)
            pl.BlockSpec((D_IN, H1_P), lambda i: (0, 0)),   # w1 (VMEM resident)
            pl.BlockSpec((1, H1_P), lambda i: (0, 0)),      # b1
            pl.BlockSpec((H1_P, H2_P), lambda i: (0, 0)),   # w2
            pl.BlockSpec((1, H2_P), lambda i: (0, 0)),      # b2
            pl.BlockSpec((H2_P, OUT_P), lambda i: (0, 0)),  # w3
            pl.BlockSpec((1, OUT_P), lambda i: (0, 0)),     # b3
        ],
        out_specs=pl.BlockSpec((tb, OUT_P), lambda i: (i, 0)),
        compiler_params=pltpu.CompilerParams(
            dimension_semantics=("parallel",),
            vmem_limit_bytes=48 * 1024 * 1024,
        ),
    )(x2, pparams["w1"], pparams["b1"], pparams["w2"], pparams["b2"],
      pparams["w3"], pparams["b3"])

    return out_padded[:B, :NUM_CLASSES]


def make_params(key):
    """PyTorch nn.Linear-style init, stored as (in, out) matrices."""
    ks = jax.random.split(key, 6)

    def lin(kw, kb, fan_in, fan_out):
        bound = 1.0 / float(fan_in) ** 0.5
        w = jax.random.uniform(kw, (fan_in, fan_out), jnp.float32,
                               minval=-bound, maxval=bound)
        b = jax.random.uniform(kb, (fan_out,), jnp.float32,
                               minval=-bound, maxval=bound)
        return w, b

    p = {}
    p["w1"], p["b1"] = lin(ks[0], ks[1], D_IN, H1)
    p["w2"], p["b2"] = lin(ks[2], ks[3], H1, H2)
    p["w3"], p["b3"] = lin(ks[4], ks[5], H2, NUM_CLASSES)
    return p


def reference_forward(x, params):
    """Pure-JAX reference matching the PyTorch forward."""
    x2 = x.reshape(x.shape[0], -1).astype(jnp.float32)
    h1 = jnp.maximum(x2 @ params["w1"] + params["b1"], 0.0)
    h2 = jnp.maximum(h1 @ params["w2"] + params["b2"], 0.0)
    logits = h2 @ params["w3"] + params["b3"]
    return jax.nn.log_softmax(logits, axis=1)


if __name__ == "__main__":
    key = jax.random.PRNGKey(0)
    kx, kp = jax.random.split(key)

    x = jax.random.normal(kx, (2, 1, 28, 28), jnp.float32)  # MNIST-like NCHW
    params = make_params(kp)
    ref = reference_forward(x, params)

    # f32 operands (default, bit-tight vs f32 reference).
    p_f32 = prepare_params(params, jnp.float32)
    out = jax.block_until_ready(lenet_forward(x, p_f32))
    assert out.shape == (2, NUM_CLASSES), out.shape
    assert jnp.allclose(out, ref, rtol=1e-4, atol=1e-4), \
        float(jnp.max(jnp.abs(out - ref)))

    # bf16 operands (v6e/v7x mem-bound configuration): halves the dominant x
    # HBM read; checked against the f32 reference at a bf16-appropriate
    # tolerance.
    p_bf16 = prepare_params(params, jnp.bfloat16)
    out_bf16 = jax.block_until_ready(lenet_forward(x, p_bf16))
    assert out_bf16.shape == (2, NUM_CLASSES), out_bf16.shape
    assert jnp.allclose(out_bf16, ref, rtol=0.0, atol=5e-2), \
        float(jnp.max(jnp.abs(out_bf16 - ref)))

    print("KERNEL_OK")
</pallas_src>

<mosaic_0001>
module attributes {stable_mosaic.version = 11 : i64} {
  func.func @_lenet_kernel(%arg0: i32, %arg1: memref<16x784xf32, #tpu.memory_space<vmem>>, %arg2: memref<784x384xf32, #tpu.memory_space<vmem>>, %arg3: memref<1x384xf32, #tpu.memory_space<vmem>>, %arg4: memref<384x128xf32, #tpu.memory_space<vmem>>, %arg5: memref<1x128xf32, #tpu.memory_space<vmem>>, %arg6: memref<128x128xf32, #tpu.memory_space<vmem>>, %arg7: memref<1x128xf32, #tpu.memory_space<vmem>>, %arg8: memref<16x128xf32, #tpu.memory_space<vmem>>) attributes {dimension_semantics = [#tpu.dimension_semantics<parallel>], iteration_bounds = array<i64: 1>, scalar_prefetch = 0 : i64, scratch_operands = 0 : i64, tpu.core_type = #tpu.core_type<tc>, window_params = [{transform_indices = @transform_0, window_bounds = array<i64: 16, 784>}, {pipeline_mode = #tpu.pipeline_mode<synchronous>, transform_indices = @transform_1, window_bounds = array<i64: 784, 384>}, {pipeline_mode = #tpu.pipeline_mode<synchronous>, transform_indices = @transform_2, window_bounds = array<i64: 1, 384>}, {pipeline_mode = #tpu.pipeline_mode<synchronous>, transform_indices = @transform_3, window_bounds = array<i64: 384, 128>}, {pipeline_mode = #tpu.pipeline_mode<synchronous>, transform_indices = @transform_4, window_bounds = array<i64: 1, 128>}, {pipeline_mode = #tpu.pipeline_mode<synchronous>, transform_indices = @transform_5, window_bounds = array<i64: 128, 128>}, {pipeline_mode = #tpu.pipeline_mode<synchronous>, transform_indices = @transform_6, window_bounds = array<i64: 1, 128>}, {transform_indices = @transform_7, window_bounds = array<i64: 16, 128>}]} {
    %c0 = arith.constant 0 : index
    %c0_0 = arith.constant 0 : index
    %0 = vector.load %arg1[%c0, %c0_0] : memref<16x784xf32, #tpu.memory_space<vmem>>, vector<16x784xf32>
    %c0_1 = arith.constant 0 : index
    %c0_2 = arith.constant 0 : index
    %1 = vector.load %arg2[%c0_1, %c0_2] : memref<784x384xf32, #tpu.memory_space<vmem>>, vector<784x384xf32>
    %cst = arith.constant dense<0.000000e+00> : vector<16x384xf32>
    %2 = tpu.matmul %0, %1, %cst {dimension_numbers = #tpu.dot_dimension_numbers<[1], [0], [0], [1], [0, 0, 1, 1], [], []>} : vector<16x784xf32>, vector<784x384xf32>, vector<16x384xf32> -> vector<16x384xf32>
    %c0_3 = arith.constant 0 : index
    %c0_4 = arith.constant 0 : index
    %3 = vector.load %arg3[%c0_3, %c0_4] : memref<1x384xf32, #tpu.memory_space<vmem>>, vector<1x384xf32>
    %4 = vector.broadcast %3 : vector<1x384xf32> to vector<16x384xf32>
    %5 = arith.addf %2, %4 : vector<16x384xf32>
    %cst_5 = arith.constant 0.000000e+00 : f32
    %6 = vector.broadcast %cst_5 : f32 to vector<16x384xf32>
    %7 = arith.maximumf %5, %6 : vector<16x384xf32>
    %c0_6 = arith.constant 0 : index
    %c0_7 = arith.constant 0 : index
    %8 = vector.load %arg4[%c0_6, %c0_7] : memref<384x128xf32, #tpu.memory_space<vmem>>, vector<384x128xf32>
    %cst_8 = arith.constant dense<0.000000e+00> : vector<16x128xf32>
    %9 = tpu.matmul %7, %8, %cst_8 {dimension_numbers = #tpu.dot_dimension_numbers<[1], [0], [0], [1], [0, 0, 1, 1], [], []>} : vector<16x384xf32>, vector<384x128xf32>, vector<16x128xf32> -> vector<16x128xf32>
    %c0_9 = arith.constant 0 : index
    %c0_10 = arith.constant 0 : index
    %10 = vector.load %arg5[%c0_9, %c0_10] : memref<1x128xf32, #tpu.memory_space<vmem>>, vector<1x128xf32>
    %11 = vector.broadcast %10 : vector<1x128xf32> to vector<16x128xf32>
    %12 = arith.addf %9, %11 : vector<16x128xf32>
    %cst_11 = arith.constant 0.000000e+00 : f32
    %13 = vector.broadcast %cst_11 : f32 to vector<16x128xf32>
    %14 = arith.maximumf %12, %13 : vector<16x128xf32>
    %c0_12 = arith.constant 0 : index
    %c0_13 = arith.constant 0 : index
    %15 = vector.load %arg6[%c0_12, %c0_13] : memref<128x128xf32, #tpu.memory_space<vmem>>, vector<128x128xf32>
    %cst_14 = arith.constant dense<0.000000e+00> : vector<16x128xf32>
    %16 = tpu.matmul %14, %15, %cst_14 {dimension_numbers = #tpu.dot_dimension_numbers<[1], [0], [0], [1], [0, 0, 1, 1], [], []>} : vector<16x128xf32>, vector<128x128xf32>, vector<16x128xf32> -> vector<16x128xf32>
    %c0_15 = arith.constant 0 : index
    %c0_16 = arith.constant 0 : index
    %17 = vector.load %arg7[%c0_15, %c0_16] : memref<1x128xf32, #tpu.memory_space<vmem>>, vector<1x128xf32>
    %18 = vector.broadcast %17 : vector<1x128xf32> to vector<16x128xf32>
    %19 = arith.addf %16, %18 : vector<16x128xf32>
    %20 = tpu.iota {dimensions = array<i32: 1>} : vector<16x128xi32>
    %c10_i32 = arith.constant 10 : i32
    %21 = vector.broadcast %c10_i32 : i32 to vector<16x128xi32>
    %22 = arith.cmpi slt, %20, %21 : vector<16x128xi32>
    %cst_17 = arith.constant -1.000000e+30 : f32
    %23 = vector.broadcast %cst_17 : f32 to vector<16x128xf32>
    %24 = arith.select %22, %19, %23 : vector<16x128xi1>, vector<16x128xf32>
    %cst_18 = arith.constant dense<0xFF800000> : vector<16xf32>
    %25 = vector.multi_reduction <maximumf>, %24, %cst_18 [1] : vector<16x128xf32> to vector<16xf32>
    %26 = vector.shape_cast %25 : vector<16xf32> to vector<16x1xf32>
    %27 = vector.broadcast %26 : vector<16x1xf32> to vector<16x128xf32>
    %28 = arith.subf %19, %27 : vector<16x128xf32>
    %29 = math.exp %28 : vector<16x128xf32>
    %cst_19 = arith.constant 0.000000e+00 : f32
    %30 = vector.broadcast %cst_19 : f32 to vector<16x128xf32>
    %31 = arith.select %22, %29, %30 : vector<16x128xi1>, vector<16x128xf32>
    %cst_20 = arith.constant dense<0.000000e+00> : vector<16xf32>
    %32 = vector.multi_reduction <add>, %31, %cst_20 [1] : vector<16x128xf32> to vector<16xf32>
    %33 = vector.shape_cast %32 : vector<16xf32> to vector<16x1xf32>
    %34 = math.log %33 : vector<16x1xf32>
    %35 = arith.addf %26, %34 : vector<16x1xf32>
    %36 = vector.broadcast %35 : vector<16x1xf32> to vector<16x128xf32>
    %37 = arith.subf %19, %36 : vector<16x128xf32>
    %c0_21 = arith.constant 0 : index
    %c0_22 = arith.constant 0 : index
    %38 = vector.load %arg8[%c0_21, %c0_22] : memref<16x128xf32, #tpu.memory_space<vmem>>, vector<16x128xf32>
    tpu.vector_store %arg8[%c0_21, %c0_22], %37 {strides = array<i32>} : memref<16x128xf32, #tpu.memory_space<vmem>>, vector<16x128xf32>,
    return
  }
  func.func @transform_0(%arg0: i32) -> (i32, i32) {
    %c0_i32 = arith.constant 0 : i32
    %c0_i32_0 = arith.constant 0 : i32
    return %arg0, %c0_i32 : i32, i32
  }
  func.func @transform_1(%arg0: i32) -> (i32, i32) {
    %c0_i32 = arith.constant 0 : i32
    %c0_i32_0 = arith.constant 0 : i32
    %c0_i32_1 = arith.constant 0 : i32
    return %c0_i32, %c0_i32_0 : i32, i32
  }
  func.func @transform_2(%arg0: i32) -> (i32, i32) {
    %c0_i32 = arith.constant 0 : i32
    %c0_i32_0 = arith.constant 0 : i32
    %c0_i32_1 = arith.constant 0 : i32
    return %c0_i32, %c0_i32_0 : i32, i32
  }
  func.func @transform_3(%arg0: i32) -> (i32, i32) {
    %c0_i32 = arith.constant 0 : i32
    %c0_i32_0 = arith.constant 0 : i32
    %c0_i32_1 = arith.constant 0 : i32
    return %c0_i32, %c0_i32_0 : i32, i32
  }
  func.func @transform_4(%arg0: i32) -> (i32, i32) {
    %c0_i32 = arith.constant 0 : i32
    %c0_i32_0 = arith.constant 0 : i32
    %c0_i32_1 = arith.constant 0 : i32
    return %c0_i32, %c0_i32_0 : i32, i32
  }
  func.func @transform_5(%arg0: i32) -> (i32, i32) {
    %c0_i32 = arith.constant 0 : i32
    %c0_i32_0 = arith.constant 0 : i32
    %c0_i32_1 = arith.constant 0 : i32
    return %c0_i32, %c0_i32_0 : i32, i32
  }
  func.func @transform_6(%arg0: i32) -> (i32, i32) {
    %c0_i32 = arith.constant 0 : i32
    %c0_i32_0 = arith.constant 0 : i32
    %c0_i32_1 = arith.constant 0 : i32
    return %c0_i32, %c0_i32_0 : i32, i32
  }
  func.func @transform_7(%arg0: i32) -> (i32, i32) {
    %c0_i32 = arith.constant 0 : i32
    %c0_i32_0 = arith.constant 0 : i32
    return %arg0, %c0_i32 : i32, i32
  }
}

</mosaic_0001>

<llo_original>
// kernel: tpu_custom_call.1
$region0: #{tpu_custom_call.1}
  #allocation0 [shape = 'u32[]', space=smem, size = 0x4, offset = 0x4, fixed_abs, tag = 'smem constant byte address 0x4 - core index']
  #allocation1 [shape = 'u32[144,128]{1,0:T(1,128)}', space=vmem, size = 0x12000, scoped, tag = 'internal scratch']
  %s0 = inlined_call_operand.hbm [shape: f32[16,784], index: 0, kind: input, shape index: {}]
  %s1 = inlined_call_operand.hbm [shape: f32[784,384], index: 1, kind: input, shape index: {}]
  %s2 = inlined_call_operand.hbm [shape: f32[1,384], index: 2, kind: input, shape index: {}]
  %s3 = inlined_call_operand.hbm [shape: f32[384,128], index: 3, kind: input, shape index: {}]
  %s4 = inlined_call_operand.hbm [shape: f32[1,128], index: 4, kind: input, shape index: {}]
  %s5 = inlined_call_operand.hbm [shape: f32[128,128], index: 5, kind: input, shape index: {}]
  %s6 = inlined_call_operand.hbm [shape: f32[1,128], index: 6, kind: input, shape index: {}]
  %s7 = inlined_call_operand.hbm [shape: f32[16,128], index: 7, kind: output, shape index: {}]
  %s8 = sld [smem:[#allocation0]]
  $region66: #{tpu_custom_call.1} parent=0
    _
  %s10 = ssub.s32 1, %s8
  %s11 = scalar_select 0, %s10, %s8
  $region1: #{tpu_custom_call.1} parent=0
    #allocation2 [shape = 'u8[57344]{0}', space=vmem, size = 0xe000, scoped, tag = 'input window, operand 0, single buffered']
    #allocation3 [shape = 's32[1]{0}', space=sflag, size = 0x4, scoped, tag = 'scoped memory for tpu_custom_call.1']
    #allocation4 [shape = 's32[1]{0}', space=sflag, size = 0x4, scoped, tag = 'scoped memory for tpu_custom_call.1']
    #allocation5 [shape = 'u8[1204224]{0}', space=vmem, size = 0x126000, scoped, tag = 'input window, operand 1, single buffered']
    #allocation6 [shape = 's32[1]{0}', space=sflag, size = 0x4, scoped, tag = 'scoped memory for tpu_custom_call.1']
    #allocation7 [shape = 'u8[1536]{0}', space=vmem, size = 0x800, scoped, tag = 'input window, operand 2, single buffered']
    #allocation8 [shape = 'u8[196608]{0}', space=vmem, size = 0x30000, scoped, tag = 'input window, operand 3, single buffered']
    #allocation9 [shape = 's32[1]{0}', space=sflag, size = 0x4, scoped, tag = 'scoped memory for tpu_custom_call.1']
    #allocation10 [shape = 'u8[512]{0}', space=vmem, size = 0x400, scoped, tag = 'input window, operand 4, single buffered']
    #allocation11 [shape = 'u8[65536]{0}', space=vmem, size = 0x10000, scoped, tag = 'input window, operand 5, single buffered']
    #allocation12 [shape = 's32[1]{0}', space=sflag, size = 0x4, scoped, tag = 'scoped memory for tpu_custom_call.1']
    #allocation13 [shape = 'u8[512]{0}', space=vmem, size = 0x400, scoped, tag = 'input window, operand 6, single buffered']
    #allocation14 [shape = 'u8[8192]{0}', space=vmem, size = 0x2000, scoped, tag = 'output window, operand 0, single buffered']
    %12 = vsyncpa [#allocation3], 0
    %13 = vsyncpa [#allocation6], 0
    %14 = vsyncpa [#allocation9], 0
    %15 = vsyncpa [#allocation12], 0
    %16 = vsyncpa [#allocation4], 0
    // Predicated region
    $region2: #{tpu_custom_call.1} parent=1 // pred_check
      _
    $region3: #{tpu_custom_call.1} parent=1 // pred_check_branch
      %18 = sbr.rel (0) target = $region5
    $region4: #{tpu_custom_call.1} parent=1 // pred_region
      %s20 = ssub.s32 1792, 1792
      %21 = vsyncadd [#allocation3], %s20
      %s22 = sshll.u32 [#allocation2], 4
      %s23 = int_to_ptr.vmem [resolvable:$true] %s22
      %28 = dma.hbm_to_vmem [thread:$0]  %s0, 1792, %s23, [#allocation3], 896, 896, 56
    $region5: #{tpu_custom_call.1} parent=1 // pred_fallthru
      _
    // Predicated region
    $region6: #{tpu_custom_call.1} parent=1 // pred_check
      _
    $region7: #{tpu_custom_call.1} parent=1 // pred_check_branch
      %30 = sbr.rel (0) target = $region9
    $region8: #{tpu_custom_call.1} parent=1 // pred_region
      %s32 = ssub.s32 37632, 37632
      %33 = vsyncadd [#allocation6], %s32
      %s34 = sshll.u32 [#allocation5], 4
      %s35 = int_to_ptr.vmem [resolvable:$true] %s34
      %40 = dma.hbm_to_vmem [thread:$0]  %s1, 37632, %s35, [#allocation6], 384, 384, 24
    $region9: #{tpu_custom_call.1} parent=1 // pred_fallthru
      _
    // Predicated region
    $region10: #{tpu_custom_call.1} parent=1 // pred_check
      _
    $region11: #{tpu_custom_call.1} parent=1 // pred_check_branch
      %42 = sbr.rel (0) target = $region13
    $region12: #{tpu_custom_call.1} parent=1 // pred_region
      %s44 = ssub.s32 48, 48
      %45 = vsyncadd [#allocation6], %s44
      %s47 = sshll.u32 [#allocation7], 4
      %s48 = int_to_ptr.vmem [resolvable:$true] %s47
      %50 = dma.hbm_to_vmem [thread:$0]  %s2, 48, %s48, [#allocation6]
    $region13: #{tpu_custom_call.1} parent=1 // pred_fallthru
      _
    // Predicated region
    $region14: #{tpu_custom_call.1} parent=1 // pred_check
      _
    $region15: #{tpu_custom_call.1} parent=1 // pred_check_branch
      %52 = sbr.rel (0) target = $region17
    $region16: #{tpu_custom_call.1} parent=1 // pred_region
      %s54 = ssub.s32 6144, 6144
      %55 = vsyncadd [#allocation9], %s54
      %s56 = sshll.u32 [#allocation8], 4
      %s57 = int_to_ptr.vmem [resolvable:$true] %s56
      %62 = dma.hbm_to_vmem [thread:$0]  %s3, 6144, %s57, [#allocation9], 128, 128, 8
    $region17: #{tpu_custom_call.1} parent=1 // pred_fallthru
      _
    // Predicated region
    $region18: #{tpu_custom_call.1} parent=1 // pred_check
      _
    $region19: #{tpu_custom_call.1} parent=1 // pred_check_branch
      %64 = sbr.rel (0) target = $region21
    $region20: #{tpu_custom_call.1} parent=1 // pred_region
      %s66 = ssub.s32 16, 16
      %67 = vsyncadd [#allocation9], %s66
      %s69 = sshll.u32 [#allocation10], 4
      %s70 = int_to_ptr.vmem [resolvable:$true] %s69
      %72 = dma.hbm_to_vmem [thread:$0]  %s4, 16, %s70, [#allocation9]
    $region21: #{tpu_custom_call.1} parent=1 // pred_fallthru
      _
    // Predicated region
    $region22: #{tpu_custom_call.1} parent=1 // pred_check
      _
    $region23: #{tpu_custom_call.1} parent=1 // pred_check_branch
      %74 = sbr.rel (0) target = $region25
    $region24: #{tpu_custom_call.1} parent=1 // pred_region
      %s76 = ssub.s32 2048, 2048
      %77 = vsyncadd [#allocation12], %s76
      %s78 = sshll.u32 [#allocation11], 4
      %s79 = int_to_ptr.vmem [resolvable:$true] %s78
      %84 = dma.hbm_to_vmem [thread:$0]  %s5, 2048, %s79, [#allocation12], 128, 128, 8
    $region25: #{tpu_custom_call.1} parent=1 // pred_fallthru
      _
    // Predicated region
    $region26: #{tpu_custom_call.1} parent=1 // pred_check
      _
    $region27: #{tpu_custom_call.1} parent=1 // pred_check_branch
      %86 = sbr.rel (0) target = $region29
    $region28: #{tpu_custom_call.1} parent=1 // pred_region
      %s88 = ssub.s32 16, 16
      %89 = vsyncadd [#allocation12], %s88
      %s91 = sshll.u32 [#allocation13], 4
      %s92 = int_to_ptr.vmem [resolvable:$true] %s91
      %94 = dma.hbm_to_vmem [thread:$0]  %s6, 16, %s92, [#allocation12]
    $region29: #{tpu_custom_call.1} parent=1 // pred_fallthru
      _
    // Predicated region
    $region30: #{tpu_custom_call.1} parent=1 // pred_check
      _
    $region31: #{tpu_custom_call.1} parent=1 // pred_check_branch
      %96 = sbr.rel (0) target = $region33
    $region32: #{tpu_custom_call.1} parent=1 // pred_region
      %97 = dma.done [#allocation3], 1792
    $region33: #{tpu_custom_call.1} parent=1 // pred_fallthru
      _
    // Predicated region
    $region34: #{tpu_custom_call.1} parent=1 // pred_check
      _
    $region35: #{tpu_custom_call.1} parent=1 // pred_check_branch
      %99 = sbr.rel (0) target = $region37
    $region36: #{tpu_custom_call.1} parent=1 // pred_region
      %100 = dma.done [#allocation6], 37632
    $region37: #{tpu_custom_call.1} parent=1 // pred_fallthru
      _
    // Predicated region
    $region38: #{tpu_custom_call.1} parent=1 // pred_check
      _
    $region39: #{tpu_custom_call.1} parent=1 // pred_check_branch
      %102 = sbr.rel (0) target = $region41
    $region40: #{tpu_custom_call.1} parent=1 // pred_region
      %103 = dma.done [#allocation6], 48
    $region41: #{tpu_custom_call.1} parent=1 // pred_fallthru
      _
    // Predicated region
    $region42: #{tpu_custom_call.1} parent=1 // pred_check
      _
    $region43: #{tpu_custom_call.1} parent=1 // pred_check_branch
      %105 = sbr.rel (0) target = $region45
    $region44: #{tpu_custom_call.1} parent=1 // pred_region
      %106 = dma.done [#allocation9], 6144
    $region45: #{tpu_custom_call.1} parent=1 // pred_fallthru
      _
    // Predicated region
    $region46: #{tpu_custom_call.1} parent=1 // pred_check
      _
    $region47: #{tpu_custom_call.1} parent=1 // pred_check_branch
      %108 = sbr.rel (0) target = $region49
    $region48: #{tpu_custom_call.1} parent=1 // pred_region
      %109 = dma.done [#allocation9], 16
    $region49: #{tpu_custom_call.1} parent=1 // pred_fallthru
      _
    // Predicated region
    $region50: #{tpu_custom_call.1} parent=1 // pred_check
      _
    $region51: #{tpu_custom_call.1} parent=1 // pred_check_branch
      %111 = sbr.rel (0) target = $region53
    $region52: #{tpu_custom_call.1} parent=1 // pred_region
      %112 = dma.done [#allocation12], 2048
    $region53: #{tpu_custom_call.1} parent=1 // pred_fallthru
      _
    // Predicated region
    $region54: #{tpu_custom_call.1} parent=1 // pred_check
      _
    $region55: #{tpu_custom_call.1} parent=1 // pred_check_branch
      %114 = sbr.rel (0) target = $region57
    $region56: #{tpu_custom_call.1} parent=1 // pred_region
      %115 = dma.done [#allocation12], 16
    $region57: #{tpu_custom_call.1} parent=1 // pred_fallthru
      _
    %v116 = vld [vmem:[#allocation2] sm:$0xff]
    %v117 = vld [vmem:[#allocation2 + $0x8] sm:$0xff]
    %v118 = vld [vmem:[#allocation2 + $0x10] sm:$0xff]
    %v119 = vld [vmem:[#allocation2 + $0x18] sm:$0xff]
    %v120 = vld [vmem:[#allocation2 + $0x20] sm:$0xff]
    %v121 = vld [vmem:[#allocation2 + $0x28] sm:$0xff]
    %v122 = vld [vmem:[#allocation2 + $0x30] sm:$0xff]
    %v123 = vld [vmem:[#allocation2 + $0x38] sm:$0xff]
    %v124 = vld [vmem:[#allocation2 + $0x40] sm:$0xff]
    %v125 = vld [vmem:[#allocation2 + $0x48] sm:$0xff]
    %v126 = vld [vmem:[#allocation2 + $0x50] sm:$0xff]
    %v127 = vld [vmem:[#allocation2 + $0x58] sm:$0xff]
    %v128 = vld [vmem:[#allocation2 + $0x60] sm:$0xff]
    %v129 = vld [vmem:[#allocation2 + $0x68] sm:$0xff]
    %v130 = vld [vmem:[#allocation5] sm:$0xff]
    %v131 = vld [vmem:[#allocation5 + $0x8] sm:$0xff]
    %v132 = vld [vmem:[#allocation5 + $0x10] sm:$0xff]
    %v133 = vld [vmem:[#allocation5 + $0x18] sm:$0xff]
    %v134 = vld [vmem:[#allocation5 + $0x20] sm:$0xff]
    %v135 = vld [vmem:[#allocation5 + $0x28] sm:$0xff]
    %v136 = vld [vmem:[#allocation5 + $0x30] sm:$0xff]
    %v137 = vld [vmem:[#allocation5 + $0x38] sm:$0xff]
    %v138 = vld [vmem:[#allocation5 + $0x40] sm:$0xff]
    %v139 = vld [vmem:[#allocation5 + $0x48] sm:$0xff]
    %v140 = vld [vmem:[#allocation5 + $0x50] sm:$0xff]
    %v141 = vld [vmem:[#allocation5 + $0x58] sm:$0xff]
    %v142 = vld [vmem:[#allocation5 + $0x60] sm:$0xff]
    %v143 = vld [vmem:[#allocation5 + $0x68] sm:$0xff]
    %v144 = vld [vmem:[#allocation5 + $0x70] sm:$0xff]
    %v145 = vld [vmem:[#allocation5 + $0x78] sm:$0xff]
    %v146 = vld [vmem:[#allocation5 + $0x80] sm:$0xff]
    %v147 = vld [vmem:[#allocation5 + $0x88] sm:$0xff]
    %v148 = vld [vmem:[#allocation5 + $0x90] sm:$0xff]
    %v149 = vld [vmem:[#allocation5 + $0x98] sm:$0xff]
    %v150 = vld [vmem:[#allocation5 + $0xa0] sm:$0xff]
    %v151 = vld [vmem:[#allocation5 + $0xa8] sm:$0xff]
    %v152 = vld [vmem:[#allocation5 + $0xb0] sm:$0xff]
    %v153 = vld [vmem:[#allocation5 + $0xb8] sm:$0xff]
    %v154 = vld [vmem:[#allocation5 + $0xc0] sm:$0xff]
    %v155 = vld [vmem:[#allocation5 + $0xc8] sm:$0xff]
    %v156 = vld [vmem:[#allocation5 + $0xd0] sm:$0xff]
    %v157 = vld [vmem:[#allocation5 + $0xd8] sm:$0xff]
    %v158 = vld [vmem:[#allocation5 + $0xe0] sm:$0xff]
    %v159 = vld [vmem:[#allocation5 + $0xe8] sm:$0xff]
    %v160 = vld [vmem:[#allocation5 + $0xf0] sm:$0xff]
    %v161 = vld [vmem:[#allocation5 + $0xf8] sm:$0xff]
    %v162 = vld [vmem:[#allocation5 + $0x100] sm:$0xff]
    %v163 = vld [vmem:[#allocation5 + $0x108] sm:$0xff]
    %v164 = vld [vmem:[#allocation5 + $0x110] sm:$0xff]
    %v165 = vld [vmem:[#allocation5 + $0x118] sm:$0xff]
    %v166 = vld [vmem:[#allocation5 + $0x120] sm:$0xff]
    %v167 = vld [vmem:[#allocation5 + $0x128] sm:$0xff]
    %v168 = vld [vmem:[#allocation5 + $0x130] sm:$0xff]
    %v169 = vld [vmem:[#allocation5 + $0x138] sm:$0xff]
    %v170 = vld [vmem:[#allocation5 + $0x140] sm:$0xff]
    %v171 = vld [vmem:[#allocation5 + $0x148] sm:$0xff]
    %v172 = vld [vmem:[#allocation5 + $0x150] sm:$0xff]
    %v173 = vld [vmem:[#allocation5 + $0x158] sm:$0xff]
    %v174 = vld [vmem:[#allocation5 + $0x160] sm:$0xff]
    %v175 = vld [vmem:[#allocation5 + $0x168] sm:$0xff]
    %v176 = vld [vmem:[#allocation5 + $0x170] sm:$0xff]
    %v177 = vld [vmem:[#allocation5 + $0x178] sm:$0xff]
    %v178 = vld [vmem:[#allocation5 + $0x180] sm:$0xff]
    %v179 = vld [vmem:[#allocation5 + $0x188] sm:$0xff]
    %v180 = vld [vmem:[#allocation5 + $0x190] sm:$0xff]
    %v181 = vld [vmem:[#allocation5 + $0x198] sm:$0xff]
    %v182 = vld [vmem:[#allocation5 + $0x1a0] sm:$0xff]
    %v183 = vld [vmem:[#allocation5 + $0x1a8] sm:$0xff]
    %v184 = vld [vmem:[#allocation5 + $0x1b0] sm:$0xff]
    %v185 = vld [vmem:[#allocation5 + $0x1b8] sm:$0xff]
    %v186 = vld [vmem:[#allocation5 + $0x1c0] sm:$0xff]
    %v187 = vld [vmem:[#allocation5 + $0x1c8] sm:$0xff]
    %v188 = vld [vmem:[#allocation5 + $0x1d0] sm:$0xff]
    %v189 = vld [vmem:[#allocation5 + $0x1d8] sm:$0xff]
    %v190 = vld [vmem:[#allocation5 + $0x1e0] sm:$0xff]
    %v191 = vld [vmem:[#allocation5 + $0x1e8] sm:$0xff]
    %v192 = vld [vmem:[#allocation5 + $0x1f0] sm:$0xff]
    %v193 = vld [vmem:[#allocation5 + $0x1f8] sm:$0xff]
    %v194 = vld [vmem:[#allocation5 + $0x200] sm:$0xff]
    %v195 = vld [vmem:[#allocation5 + $0x208] sm:$0xff]
    %v196 = vld [vmem:[#allocation5 + $0x210] sm:$0xff]
    %v197 = vld [vmem:[#allocation5 + $0x218] sm:$0xff]
    %v198 = vld [vmem:[#allocation5 + $0x220] sm:$0xff]
    %v199 = vld [vmem:[#allocation5 + $0x228] sm:$0xff]
    %v200 = vld [vmem:[#allocation5 + $0x230] sm:$0xff]
    %v201 = vld [vmem:[#allocation5 + $0x238] sm:$0xff]
    %v202 = vld [vmem:[#allocation5 + $0x240] sm:$0xff]
    %v203 = vld [vmem:[#allocation5 + $0x248] sm:$0xff]
    %v204 = vld [vmem:[#allocation5 + $0x250] sm:$0xff]
    %v205 = vld [vmem:[#allocation5 + $0x258] sm:$0xff]
    %v206 = vld [vmem:[#allocation5 + $0x260] sm:$0xff]
    %v207 = vld [vmem:[#allocation5 + $0x268] sm:$0xff]
    %v208 = vld [vmem:[#allocation5 + $0x270] sm:$0xff]
    %v209 = vld [vmem:[#allocation5 + $0x278] sm:$0xff]
    %v210 = vld [vmem:[#allocation5 + $0x280] sm:$0xff]
    %v211 = vld [vmem:[#allocation5 + $0x288] sm:$0xff]
    %v212 = vld [vmem:[#allocation5 + $0x290] sm:$0xff]
    %v213 = vld [vmem:[#allocation5 + $0x298] sm:$0xff]
    %v214 = vld [vmem:[#allocation5 + $0x2a0] sm:$0xff]
    %v215 = vld [vmem:[#allocation5 + $0x2a8] sm:$0xff]
    %v216 = vld [vmem:[#allocation5 + $0x2b0] sm:$0xff]
    %v217 = vld [vmem:[#allocation5 + $0x2b8] sm:$0xff]
    %v218 = vld [vmem:[#allocation5 + $0x2c0] sm:$0xff]
    %v219 = vld [vmem:[#allocation5 + $0x2c8] sm:$0xff]
    %v220 = vld [vmem:[#allocation5 + $0x2d0] sm:$0xff]
    %v221 = vld [vmem:[#allocation5 + $0x2d8] sm:$0xff]
    %v222 = vld [vmem:[#allocation5 + $0x2e0] sm:$0xff]
    %v223 = vld [vmem:[#allocation5 + $0x2e8] sm:$0xff]
    %v224 = vld [vmem:[#allocation5 + $0x2f0] sm:$0xff]
    %v225 = vld [vmem:[#allocation5 + $0x2f8] sm:$0xff]
    %v226 = vld [vmem:[#allocation5 + $0x300] sm:$0xff]
    %v227 = vld [vmem:[#allocation5 + $0x308] sm:$0xff]
    %v228 = vld [vmem:[#allocation5 + $0x310] sm:$0xff]
    %v229 = vld [vmem:[#allocation5 + $0x318] sm:$0xff]
    %v230 = vld [vmem:[#allocation5 + $0x320] sm:$0xff]
    %v231 = vld [vmem:[#allocation5 + $0x328] sm:$0xff]
    %v232 = vld [vmem:[#allocation5 + $0x330] sm:$0xff]
    %v233 = vld [vmem:[#allocation5 + $0x338] sm:$0xff]
    %v234 = vld [vmem:[#allocation5 + $0x340] sm:$0xff]
    %v235 = vld [vmem:[#allocation5 + $0x348] sm:$0xff]
    %v236 = vld [vmem:[#allocation5 + $0x350] sm:$0xff]
    %v237 = vld [vmem:[#allocation5 + $0x358] sm:$0xff]
    %v238 = vld [vmem:[#allocation5 + $0x360] sm:$0xff]
    %v239 = vld [vmem:[#allocation5 + $0x368] sm:$0xff]
    %v240 = vld [vmem:[#allocation5 + $0x370] sm:$0xff]
    %v241 = vld [vmem:[#allocation5 + $0x378] sm:$0xff]
    %v242 = vld [vmem:[#allocation5 + $0x380] sm:$0xff]
    %v243 = vld [vmem:[#allocation5 + $0x388] sm:$0xff]
    %v244 = vld [vmem:[#allocation5 + $0x390] sm:$0xff]
    %v245 = vld [vmem:[#allocation5 + $0x398] sm:$0xff]
    %v246 = vld [vmem:[#allocation5 + $0x3a0] sm:$0xff]
    %v247 = vld [vmem:[#allocation5 + $0x3a8] sm:$0xff]
    %v248 = vld [vmem:[#allocation5 + $0x3b0] sm:$0xff]
    %v249 = vld [vmem:[#allocation5 + $0x3b8] sm:$0xff]
    %v250 = vld [vmem:[#allocation5 + $0x3c0] sm:$0xff]
    %v251 = vld [vmem:[#allocation5 + $0x3c8] sm:$0xff]
    %v252 = vld [vmem:[#allocation5 + $0x3d0] sm:$0xff]
    %v253 = vld [vmem:[#allocation5 + $0x3d8] sm:$0xff]
    %v254 = vld [vmem:[#allocation5 + $0x3e0] sm:$0xff]
    %v255 = vld [vmem:[#allocation5 + $0x3e8] sm:$0xff]
    %v256 = vld [vmem:[#allocation5 + $0x3f0] sm:$0xff]
    %v257 = vld [vmem:[#allocation5 + $0x3f8] sm:$0xff]
    %v258 = vld [vmem:[#allocation5 + $0x400] sm:$0xff]
    %v259 = vld [vmem:[#allocation5 + $0x408] sm:$0xff]
    %v260 = vld [vmem:[#allocation5 + $0x410] sm:$0xff]
    %v261 = vld [vmem:[#allocation5 + $0x418] sm:$0xff]
    %v262 = vld [vmem:[#allocation5 + $0x420] sm:$0xff]
    %v263 = vld [vmem:[#allocation5 + $0x428] sm:$0xff]
    %v264 = vld [vmem:[#allocation5 + $0x430] sm:$0xff]
    %v265 = vld [vmem:[#allocation5 + $0x438] sm:$0xff]
    %v266 = vld [vmem:[#allocation5 + $0x440] sm:$0xff]
    %v267 = vld [vmem:[#allocation5 + $0x448] sm:$0xff]
    %v268 = vld [vmem:[#allocation5 + $0x450] sm:$0xff]
    %v269 = vld [vmem:[#allocation5 + $0x458] sm:$0xff]
    %v270 = vld [vmem:[#allocation5 + $0x460] sm:$0xff]
    %v271 = vld [vmem:[#allocation5 + $0x468] sm:$0xff]
    %v272 = vld [vmem:[#allocation5 + $0x470] sm:$0xff]
    %v273 = vld [vmem:[#allocation5 + $0x478] sm:$0xff]
    %v274 = vld [vmem:[#allocation5 + $0x480] sm:$0xff]
    %v275 = vld [vmem:[#allocation5 + $0x488] sm:$0xff]
    %v276 = vld [vmem:[#allocation5 + $0x490] sm:$0xff]
    %v277 = vld [vmem:[#allocation5 + $0x498] sm:$0xff]
    %v278 = vld [vmem:[#allocation5 + $0x4a0] sm:$0xff]
    %v279 = vld [vmem:[#allocation5 + $0x4a8] sm:$0xff]
    %v280 = vld [vmem:[#allocation5 + $0x4b0] sm:$0xff]
    %v281 = vld [vmem:[#allocation5 + $0x4b8] sm:$0xff]
    %v282 = vld [vmem:[#allocation5 + $0x4c0] sm:$0xff]
    %v283 = vld [vmem:[#allocation5 + $0x4c8] sm:$0xff]
    %v284 = vld [vmem:[#allocation5 + $0x4d0] sm:$0xff]
    %v285 = vld [vmem:[#allocation5 + $0x4d8] sm:$0xff]
    %v286 = vld [vmem:[#allocation5 + $0x4e0] sm:$0xff]
    %v287 = vld [vmem:[#allocation5 + $0x4e8] sm:$0xff]
    %v288 = vld [vmem:[#allocation5 + $0x4f0] sm:$0xff]
    %v289 = vld [vmem:[#allocation5 + $0x4f8] sm:$0xff]
    %v290 = vld [vmem:[#allocation5 + $0x500] sm:$0xff]
    %v291 = vld [vmem:[#allocation5 + $0x508] sm:$0xff]
    %v292 = vld [vmem:[#allocation5 + $0x510] sm:$0xff]
    %v293 = vld [vmem:[#allocation5 + $0x518] sm:$0xff]
    %v294 = vld [vmem:[#allocation5 + $0x520] sm:$0xff]
    %v295 = vld [vmem:[#allocation5 + $0x528] sm:$0xff]
    %v296 = vld [vmem:[#allocation5 + $0x530] sm:$0xff]
    %v297 = vld [vmem:[#allocation5 + $0x538] sm:$0xff]
    %v298 = vld [vmem:[#allocation5 + $0x540] sm:$0xff]
    %v299 = vld [vmem:[#allocation5 + $0x548] sm:$0xff]
    %v300 = vld [vmem:[#allocation5 + $0x550] sm:$0xff]
    %v301 = vld [vmem:[#allocation5 + $0x558] sm:$0xff]
    %v302 = vld [vmem:[#allocation5 + $0x560] sm:$0xff]
    %v303 = vld [vmem:[#allocation5 + $0x568] sm:$0xff]
    %v304 = vld [vmem:[#allocation5 + $0x570] sm:$0xff]
    %v305 = vld [vmem:[#allocation5 + $0x578] sm:$0xff]
    %v306 = vld [vmem:[#allocation5 + $0x580] sm:$0xff]
    %v307 = vld [vmem:[#allocation5 + $0x588] sm:$0xff]
    %v308 = vld [vmem:[#allocation5 + $0x590] sm:$0xff]
    %v309 = vld [vmem:[#allocation5 + $0x598] sm:$0xff]
    %v310 = vld [vmem:[#allocation5 + $0x5a0] sm:$0xff]
    %v311 = vld [vmem:[#allocation5 + $0x5a8] sm:$0xff]
    %v312 = vld [vmem:[#allocation5 + $0x5b0] sm:$0xff]
    %v313 = vld [vmem:[#allocation5 + $0x5b8] sm:$0xff]
    %v314 = vld [vmem:[#allocation5 + $0x5c0] sm:$0xff]
    %v315 = vld [vmem:[#allocation5 + $0x5c8] sm:$0xff]
    %v316 = vld [vmem:[#allocation5 + $0x5d0] sm:$0xff]
    %v317 = vld [vmem:[#allocation5 + $0x5d8] sm:$0xff]
    %v318 = vld [vmem:[#allocation5 + $0x5e0] sm:$0xff]
    %v319 = vld [vmem:[#allocation5 + $0x5e8] sm:$0xff]
    %v320 = vld [vmem:[#allocation5 + $0x5f0] sm:$0xff]
    %v321 = vld [vmem:[#allocation5 + $0x5f8] sm:$0xff]
    %v322 = vld [vmem:[#allocation5 + $0x600] sm:$0xff]
    %v323 = vld [vmem:[#allocation5 + $0x608] sm:$0xff]
    %v324 = vld [vmem:[#allocation5 + $0x610] sm:$0xff]
    %v325 = vld [vmem:[#allocation5 + $0x618] sm:$0xff]
    %v326 = vld [vmem:[#allocation5 + $0x620] sm:$0xff]
    %v327 = vld [vmem:[#allocation5 + $0x628] sm:$0xff]
    %v328 = vld [vmem:[#allocation5 + $0x630] sm:$0xff]
    %v329 = vld [vmem:[#allocation5 + $0x638] sm:$0xff]
    %v330 = vld [vmem:[#allocation5 + $0x640] sm:$0xff]
    %v331 = vld [vmem:[#allocation5 + $0x648] sm:$0xff]
    %v332 = vld [vmem:[#allocation5 + $0x650] sm:$0xff]
    %v333 = vld [vmem:[#allocation5 + $0x658] sm:$0xff]
    %v334 = vld [vmem:[#allocation5 + $0x660] sm:$0xff]
    %v335 = vld [vmem:[#allocation5 + $0x668] sm:$0xff]
    %v336 = vld [vmem:[#allocation5 + $0x670] sm:$0xff]
    %v337 = vld [vmem:[#allocation5 + $0x678] sm:$0xff]
    %v338 = vld [vmem:[#allocation5 + $0x680] sm:$0xff]
    %v339 = vld [vmem:[#allocation5 + $0x688] sm:$0xff]
    %v340 = vld [vmem:[#allocation5 + $0x690] sm:$0xff]
    %v341 = vld [vmem:[#allocation5 + $0x698] sm:$0xff]
    %v342 = vld [vmem:[#allocation5 + $0x6a0] sm:$0xff]
    %v343 = vld [vmem:[#allocation5 + $0x6a8] sm:$0xff]
    %v344 = vld [vmem:[#allocation5 + $0x6b0] sm:$0xff]
    %v345 = vld [vmem:[#allocation5 + $0x6b8] sm:$0xff]
    %v346 = vld [vmem:[#allocation5 + $0x6c0] sm:$0xff]
    %v347 = vld [vmem:[#allocation5 + $0x6c8] sm:$0xff]
    %v348 = vld [vmem:[#allocation5 + $0x6d0] sm:$0xff]
    %v349 = vld [vmem:[#allocation5 + $0x6d8] sm:$0xff]
    %v350 = vld [vmem:[#allocation5 + $0x6e0] sm:$0xff]
    %v351 = vld [vmem:[#allocation5 + $0x6e8] sm:$0xff]
    %v352 = vld [vmem:[#allocation5 + $0x6f0] sm:$0xff]
    %v353 = vld [vmem:[#allocation5 + $0x6f8] sm:$0xff]
    %v354 = vld [vmem:[#allocation5 + $0x700] sm:$0xff]
    %v355 = vld [vmem:[#allocation5 + $0x708] sm:$0xff]
    %v356 = vld [vmem:[#allocation5 + $0x710] sm:$0xff]
    %v357 = vld [vmem:[#allocation5 + $0x718] sm:$0xff]
    %v358 = vld [vmem:[#allocation5 + $0x720] sm:$0xff]
    %v359 = vld [vmem:[#allocation5 + $0x728] sm:$0xff]
    %v360 = vld [vmem:[#allocation5 + $0x730] sm:$0xff]
    %v361 = vld [vmem:[#allocation5 + $0x738] sm:$0xff]
    %v362 = vld [vmem:[#allocation5 + $0x740] sm:$0xff]
    %v363 = vld [vmem:[#allocation5 + $0x748] sm:$0xff]
    %v364 = vld [vmem:[#allocation5 + $0x750] sm:$0xff]
    %v365 = vld [vmem:[#allocation5 + $0x758] sm:$0xff]
    %v366 = vld [vmem:[#allocation5 + $0x760] sm:$0xff]
    %v367 = vld [vmem:[#allocation5 + $0x768] sm:$0xff]
    %v368 = vld [vmem:[#allocation5 + $0x770] sm:$0xff]
    %v369 = vld [vmem:[#allocation5 + $0x778] sm:$0xff]
    %v370 = vld [vmem:[#allocation5 + $0x780] sm:$0xff]
    %v371 = vld [vmem:[#allocation5 + $0x788] sm:$0xff]
    %v372 = vld [vmem:[#allocation5 + $0x790] sm:$0xff]
    %v373 = vld [vmem:[#allocation5 + $0x798] sm:$0xff]
    %v374 = vld [vmem:[#allocation5 + $0x7a0] sm:$0xff]
    %v375 = vld [vmem:[#allocation5 + $0x7a8] sm:$0xff]
    %v376 = vld [vmem:[#allocation5 + $0x7b0] sm:$0xff]
    %v377 = vld [vmem:[#allocation5 + $0x7b8] sm:$0xff]
    %v378 = vld [vmem:[#allocation5 + $0x7c0] sm:$0xff]
    %v379 = vld [vmem:[#allocation5 + $0x7c8] sm:$0xff]
    %v380 = vld [vmem:[#allocation5 + $0x7d0] sm:$0xff]
    %v381 = vld [vmem:[#allocation5 + $0x7d8] sm:$0xff]
    %v382 = vld [vmem:[#allocation5 + $0x7e0] sm:$0xff]
    %v383 = vld [vmem:[#allocation5 + $0x7e8] sm:$0xff]
    %v384 = vld [vmem:[#allocation5 + $0x7f0] sm:$0xff]
    %v385 = vld [vmem:[#allocation5 + $0x7f8] sm:$0xff]
    %v386 = vld [vmem:[#allocation5 + $0x800] sm:$0xff]
    %v387 = vld [vmem:[#allocation5 + $0x808] sm:$0xff]
    %v388 = vld [vmem:[#allocation5 + $0x810] sm:$0xff]
    %v389 = vld [vmem:[#allocation5 + $0x818] sm:$0xff]
    %v390 = vld [vmem:[#allocation5 + $0x820] sm:$0xff]
    %v391 = vld [vmem:[#allocation5 + $0x828] sm:$0xff]
    %v392 = vld [vmem:[#allocation5 + $0x830] sm:$0xff]
    %v393 = vld [vmem:[#allocation5 + $0x838] sm:$0xff]
    %v394 = vld [vmem:[#allocation5 + $0x840] sm:$0xff]
    %v395 = vld [vmem:[#allocation5 + $0x848] sm:$0xff]
    %v396 = vld [vmem:[#allocation5 + $0x850] sm:$0xff]
    %v397 = vld [vmem:[#allocation5 + $0x858] sm:$0xff]
    %v398 = vld [vmem:[#allocation5 + $0x860] sm:$0xff]
    %v399 = vld [vmem:[#allocation5 + $0x868] sm:$0xff]
    %v400 = vld [vmem:[#allocation5 + $0x870] sm:$0xff]
    %v401 = vld [vmem:[#allocation5 + $0x878] sm:$0xff]
    %v402 = vld [vmem:[#allocation5 + $0x880] sm:$0xff]
    %v403 = vld [vmem:[#allocation5 + $0x888] sm:$0xff]
    %v404 = vld [vmem:[#allocation5 + $0x890] sm:$0xff]
    %v405 = vld [vmem:[#allocation5 + $0x898] sm:$0xff]
    %v406 = vld [vmem:[#allocation5 + $0x8a0] sm:$0xff]
    %v407 = vld [vmem:[#allocation5 + $0x8a8] sm:$0xff]
    %v408 = vld [vmem:[#allocation5 + $0x8b0] sm:$0xff]
    %v409 = vld [vmem:[#allocation5 + $0x8b8] sm:$0xff]
    %v410 = vld [vmem:[#allocation5 + $0x8c0] sm:$0xff]
    %v411 = vld [vmem:[#allocation5 + $0x8c8] sm:$0xff]
    %v412 = vld [vmem:[#allocation5 + $0x8d0] sm:$0xff]
    %v413 = vld [vmem:[#allocation5 + $0x8d8] sm:$0xff]
    %v414 = vld [vmem:[#allocation5 + $0x8e0] sm:$0xff]
    %v415 = vld [vmem:[#allocation5 + $0x8e8] sm:$0xff]
    %v416 = vld [vmem:[#allocation5 + $0x8f0] sm:$0xff]
    %v417 = vld [vmem:[#allocation5 + $0x8f8] sm:$0xff]
    %v418 = vld [vmem:[#allocation5 + $0x900] sm:$0xff]
    %v419 = vld [vmem:[#allocation5 + $0x908] sm:$0xff]
    %v420 = vld [vmem:[#allocation5 + $0x910] sm:$0xff]
    %v421 = vld [vmem:[#allocation5 + $0x918] sm:$0xff]
    %v422 = vld [vmem:[#allocation5 + $0x920] sm:$0xff]
    %v423 = vld [vmem:[#allocation5 + $0x928] sm:$0xff]
    %v424 = vld [vmem:[#allocation7] sm:$0x7]
    %v426 = vlaneseq
    %v427 = vshrl.u32 %v426, 7
    %v428 = vsub.s32 0, %v427
    %v429 = vrot.slane %v424, %v428
    %v430 = vlaneseq
    %v431 = vshrl.u32 %v430, 7
    %v432 = vsub.s32 1, %v431
    %v433 = vrot.slane %v424, %v432
    %v434 = vlaneseq
    %v435 = vshrl.u32 %v434, 7
    %v436 = vsub.s32 2, %v435
    %v437 = vrot.slane %v424, %v436
    %vm441 = vcmask 130048
    %v443 = vsel %vm441, %v122, 0
    %v446 = vsel %vm441, %v129, 0
    %448 = vmatprep.subr.mxu0 %v176
    %449 = vmatpush1.msra.mxu0 %v175
    %450 = vmatprep.subr.mxu0 %v173
    %451 = vmatpush1.msra.mxu0 %v172
    %452 = vmatprep.subr.mxu0 %v170
    %453 = vmatpush1.msra.mxu0 %v169
    %454 = vmatprep.subr.mxu0 %v167
    %455 = vmatpush1.msra.mxu0 %v166
    %456 = vmatprep.subr.mxu0 %v164
    %457 = vmatpush1.msra.mxu0 %v163
    %458 = vmatprep.subr.mxu0 %v161
    %459 = vmatpush1.msra.mxu0 %v160
    %460 = vmatprep.subr.mxu0 %v158
    %461 = vmatpush1.msra.mxu0 %v157
    %462 = vmatprep.subr.mxu0 %v155
    %463 = vmatpush1.msra.mxu0 %v154
    %464 = vmatprep.subr.mxu0 %v152
    %465 = vmatpush1.msra.mxu0 %v151
    %466 = vmatprep.subr.mxu0 %v149
    %467 = vmatpush1.msra.mxu0 %v148
    %468 = vmatprep.subr.mxu0 %v146
    %469 = vmatpush1.msra.mxu0 %v145
    %470 = vmatprep.subr.mxu0 %v143
    %471 = vmatpush1.msra.mxu0 %v142
    %472 = vmatprep.subr.mxu0 %v140
    %473 = vmatpush1.msra.mxu0 %v139
    %474 = vmatprep.subr.mxu0 %v137
    %475 = vmatpush1.msra.mxu0 %v136
    %476 = vmatprep.subr.mxu0 %v134
    %477 = vmatpush1.msra.mxu0 %v133
    %478 = vmatprep.subr.mxu0 %v131
    %479 = vmatpush1.msra.mxu0 %v130
    %480 = vmatprep.subr.mxu0 %v224
    %481 = vmatpush2.msra.mxu0 %v223
    %482 = vmatprep.subr.mxu0 %v221
    %483 = vmatpush2.msra.mxu0 %v220
    %484 = vmatprep.subr.mxu0 %v218
    %485 = vmatpush2.msra.mxu0 %v217
    %486 = vmatprep.subr.mxu0 %v215
    %487 = vmatpush2.msra.mxu0 %v214
    %488 = vmatprep.subr.mxu0 %v212
    %489 = vmatpush2.msra.mxu0 %v211
    %490 = vmatprep.subr.mxu0 %v209
    %491 = vmatpush2.msra.mxu0 %v208
    %492 = vmatprep.subr.mxu0 %v206
    %493 = vmatpush2.msra.mxu0 %v205
    %494 = vmatprep.subr.mxu0 %v203
    %495 = vmatpush2.msra.mxu0 %v202
    %496 = vmatprep.subr.mxu0 %v200
    %497 = vmatpush2.msra.mxu0 %v199
    %498 = vmatprep.subr.mxu0 %v197
    %499 = vmatpush2.msra.mxu0 %v196
    %500 = vmatprep.subr.mxu0 %v194
    %501 = vmatpush2.msra.mxu0 %v193
    %502 = vmatprep.subr.mxu0 %v191
    %503 = vmatpush2.msra.mxu0 %v190
    %504 = vmatprep.subr.mxu0 %v188
    %505 = vmatpush2.msra.mxu0 %v187
    %506 = vmatprep.subr.mxu0 %v185
    %507 = vmatpush2.msra.mxu0 %v184
    %508 = vmatprep.subr.mxu0 %v182
    %509 = vmatpush2.msra.mxu0 %v181
    %510 = vmatprep.subr.mxu0 %v179
    %511 = vmatpush2.msra.mxu0 %v178
    %512 = vmatprep.mubr.f32.mxu0 %v117
    %513 = vmatmul.mubr.f32.gmra.mxu0 %v116
    %v514 = vpop.f32.mrf.mxu0
    %v515 = vadd.f32 %v429, %v514
    %v516 = vpop.f32.mrf.mxu0
    %v517 = vadd.f32 %v433, %v516
    %518 = vmatprep.mubr.f32.mxu0 %v124
    %519 = vmatmul.mubr.f32.gmra.mxu0 %v123
    %v520 = vpop.f32.mrf.mxu0
    %v521 = vadd.f32 %v429, %v520
    %v522 = vpop.f32.mrf.mxu0
    %v523 = vadd.f32 %v433, %v522
    %524 = vdwg.mxu0
    %525 = vmatprep.subr.mxu0 %v272
    %526 = vmatpush1.msra.mxu0 %v271
    %527 = vmatprep.subr.mxu0 %v269
    %528 = vmatpush1.msra.mxu0 %v268
    %529 = vmatprep.subr.mxu0 %v266
    %530 = vmatpush1.msra.mxu0 %v265
    %531 = vmatprep.subr.mxu0 %v263
    %532 = vmatpush1.msra.mxu0 %v262
    %533 = vmatprep.subr.mxu0 %v260
    %534 = vmatpush1.msra.mxu0 %v259
    %535 = vmatprep.subr.mxu0 %v257
    %536 = vmatpush1.msra.mxu0 %v256
    %537 = vmatprep.subr.mxu0 %v254
    %538 = vmatpush1.msra.mxu0 %v253
    %539 = vmatprep.subr.mxu0 %v251
    %540 = vmatpush1.msra.mxu0 %v250
    %541 = vmatprep.subr.mxu0 %v248
    %542 = vmatpush1.msra.mxu0 %v247
    %543 = vmatprep.subr.mxu0 %v245
    %544 = vmatpush1.msra.mxu0 %v244
    %545 = vmatprep.subr.mxu0 %v242
    %546 = vmatpush1.msra.mxu0 %v241
    %547 = vmatprep.subr.mxu0 %v239
    %548 = vmatpush1.msra.mxu0 %v238
    %549 = vmatprep.subr.mxu0 %v236
    %550 = vmatpush1.msra.mxu0 %v235
    %551 = vmatprep.subr.mxu0 %v233
    %552 = vmatpush1.msra.mxu0 %v232
    %553 = vmatprep.subr.mxu0 %v230
    %554 = vmatpush1.msra.mxu0 %v229
    %555 = vmatprep.subr.mxu0 %v227
    %556 = vmatpush1.msra.mxu0 %v226
    %557 = vmatprep.subr.mxu0 %v320
    %558 = vmatpush2.msra.mxu0 %v319
    %559 = vmatprep.subr.mxu0 %v317
    %560 = vmatpush2.msra.mxu0 %v316
    %561 = vmatprep.subr.mxu0 %v314
    %562 = vmatpush2.msra.mxu0 %v313
    %563 = vmatprep.subr.mxu0 %v311
    %564 = vmatpush2.msra.mxu0 %v310
    %565 = vmatprep.subr.mxu0 %v308
    %566 = vmatpush2.msra.mxu0 %v307
    %567 = vmatprep.subr.mxu0 %v305
    %568 = vmatpush2.msra.mxu0 %v304
    %569 = vmatprep.subr.mxu0 %v302
    %570 = vmatpush2.msra.mxu0 %v301
    %571 = vmatprep.subr.mxu0 %v299
    %572 = vmatpush2.msra.mxu0 %v298
    %573 = vmatprep.subr.mxu0 %v296
    %574 = vmatpush2.msra.mxu0 %v295
    %575 = vmatprep.subr.mxu0 %v293
    %576 = vmatpush2.msra.mxu0 %v292
    %577 = vmatprep.subr.mxu0 %v290
    %578 = vmatpush2.msra.mxu0 %v289
    %579 = vmatprep.subr.mxu0 %v287
    %580 = vmatpush2.msra.mxu0 %v286
    %581 = vmatprep.subr.mxu0 %v284
    %582 = vmatpush2.msra.mxu0 %v283
    %583 = vmatprep.subr.mxu0 %v281
    %584 = vmatpush2.msra.mxu0 %v280
    %585 = vmatprep.subr.mxu0 %v278
    %586 = vmatpush2.msra.mxu0 %v277
    %587 = vmatprep.subr.mxu0 %v275
    %588 = vmatpush2.msra.mxu0 %v274
    %589 = vmatprep.mubr.f32.mxu0 %v119
    %590 = vmatmul.mubr.f32.gmra.mxu0 %v118
    %v591 = vpop.f32.mrf.mxu0
    %v592 = vadd.f32 %v515, %v591
    %v593 = vpop.f32.mrf.mxu0
    %v594 = vadd.f32 %v517, %v593
    %595 = vmatprep.mubr.f32.mxu0 %v126
    %596 = vmatmul.mubr.f32.gmra.mxu0 %v125
    %v597 = vpop.f32.mrf.mxu0
    %v598 = vadd.f32 %v521, %v597
    %v599 = vpop.f32.mrf.mxu0
    %v600 = vadd.f32 %v523, %v599
    %601 = vdwg.mxu0
    %602 = vmatprep.subr.mxu0 %v368
    %603 = vmatpush1.msra.mxu0 %v367
    %604 = vmatprep.subr.mxu0 %v365
    %605 = vmatpush1.msra.mxu0 %v364
    %606 = vmatprep.subr.mxu0 %v362
    %607 = vmatpush1.msra.mxu0 %v361
    %608 = vmatprep.subr.mxu0 %v359
    %609 = vmatpush1.msra.mxu0 %v358
    %610 = vmatprep.subr.mxu0 %v356
    %611 = vmatpush1.msra.mxu0 %v355
    %612 = vmatprep.subr.mxu0 %v353
    %613 = vmatpush1.msra.mxu0 %v352
    %614 = vmatprep.subr.mxu0 %v350
    %615 = vmatpush1.msra.mxu0 %v349
    %616 = vmatprep.subr.mxu0 %v347
    %617 = vmatpush1.msra.mxu0 %v346
    %618 = vmatprep.subr.mxu0 %v344
    %619 = vmatpush1.msra.mxu0 %v343
    %620 = vmatprep.subr.mxu0 %v341
    %621 = vmatpush1.msra.mxu0 %v340
    %622 = vmatprep.subr.mxu0 %v338
    %623 = vmatpush1.msra.mxu0 %v337
    %624 = vmatprep.subr.mxu0 %v335
    %625 = vmatpush1.msra.mxu0 %v334
    %626 = vmatprep.subr.mxu0 %v332
    %627 = vmatpush1.msra.mxu0 %v331
    %628 = vmatprep.subr.mxu0 %v329
    %629 = vmatpush1.msra.mxu0 %v328
    %630 = vmatprep.subr.mxu0 %v326
    %631 = vmatpush1.msra.mxu0 %v325
    %632 = vmatprep.subr.mxu0 %v323
    %633 = vmatpush1.msra.mxu0 %v322
    %634 = vmatprep.subr.mxu0 %v416
    %635 = vmatpush2.msra.mxu0 %v415
    %636 = vmatprep.subr.mxu0 %v413
    %637 = vmatpush2.msra.mxu0 %v412
    %638 = vmatprep.subr.mxu0 %v410
    %639 = vmatpush2.msra.mxu0 %v409
    %640 = vmatprep.subr.mxu0 %v407
    %641 = vmatpush2.msra.mxu0 %v406
    %642 = vmatprep.subr.mxu0 %v404
    %643 = vmatpush2.msra.mxu0 %v403
    %644 = vmatprep.subr.mxu0 %v401
    %645 = vmatpush2.msra.mxu0 %v400
    %646 = vmatprep.subr.mxu0 %v398
    %647 = vmatpush2.msra.mxu0 %v397
    %648 = vmatprep.subr.mxu0 %v395
    %649 = vmatpush2.msra.mxu0 %v394
    %650 = vmatprep.subr.mxu0 %v392
    %651 = vmatpush2.msra.mxu0 %v391
    %652 = vmatprep.subr.mxu0 %v389
    %653 = vmatpush2.msra.mxu0 %v388
    %654 = vmatprep.subr.mxu0 %v386
    %655 = vmatpush2.msra.mxu0 %v385
    %656 = vmatprep.subr.mxu0 %v383
    %657 = vmatpush2.msra.mxu0 %v382
    %658 = vmatprep.subr.mxu0 %v380
    %659 = vmatpush2.msra.mxu0 %v379
    %660 = vmatprep.subr.mxu0 %v377
    %661 = vmatpush2.msra.mxu0 %v376
    %662 = vmatprep.subr.mxu0 %v374
    %663 = vmatpush2.msra.mxu0 %v373
    %664 = vmatprep.subr.mxu0 %v371
    %665 = vmatpush2.msra.mxu0 %v370
    %666 = vmatprep.mubr.f32.mxu0 %v121
    %667 = vmatmul.mubr.f32.gmra.mxu0 %v120
    %v668 = vpop.f32.mrf.mxu0
    %v669 = vadd.f32 %v592, %v668
    %v670 = vpop.f32.mrf.mxu0
    %v671 = vadd.f32 %v594, %v670
    %672 = vmatprep.mubr.f32.mxu0 %v128
    %673 = vmatmul.mubr.f32.gmra.mxu0 %v127
    %v674 = vpop.f32.mrf.mxu0
    %v675 = vadd.f32 %v598, %v674
    %v676 = vpop.f32.mrf.mxu0
    %v677 = vadd.f32 %v600, %v676
    %678 = vdwg.mxu0
    %679 = vmatprep.subr.mxu0 0.0
    %680 = vmatpush1.msra.mxu0 0.0
    %681 = vmatprep.subr.mxu0 0.0
    %682 = vmatpush1.msra.mxu0 0.0
    %683 = vmatprep.subr.mxu0 0.0
    %684 = vmatpush1.msra.mxu0 0.0
    %685 = vmatprep.subr.mxu0 0.0
    %686 = vmatpush1.msra.mxu0 0.0
    %687 = vmatprep.subr.mxu0 0.0
    %688 = vmatpush1.msra.mxu0 0.0
    %689 = vmatprep.subr.mxu0 0.0
    %690 = vmatpush1.msra.mxu0 0.0
    %691 = vmatprep.subr.mxu0 0.0
    %692 = vmatpush1.msra.mxu0 0.0
    %693 = vmatprep.subr.mxu0 0.0
    %694 = vmatpush1.msra.mxu0 0.0
    %695 = vmatprep.subr.mxu0 0.0
    %696 = vmatpush1.msra.mxu0 0.0
    %697 = vmatprep.subr.mxu0 0.0
    %698 = vmatpush1.msra.mxu0 0.0
    %699 = vmatprep.subr.mxu0 0.0
    %700 = vmatpush1.msra.mxu0 0.0
    %701 = vmatprep.subr.mxu0 0.0
    %702 = vmatpush1.msra.mxu0 0.0
    %703 = vmatprep.subr.mxu0 0.0
    %704 = vmatpush1.msra.mxu0 0.0
    %705 = vmatprep.subr.mxu0 0.0
    %706 = vmatpush1.msra.mxu0 0.0
    %707 = vmatprep.subr.mxu0 %v422
    %708 = vmatpush1.msra.mxu0 %v421
    %709 = vmatprep.subr.mxu0 %v419
    %710 = vmatpush1.msra.mxu0 %v418
    %711 = vmatprep.subr.mxu0 0.0
    %712 = vmatpush2.msra.mxu0 0.0
    %713 = vmatprep.subr.mxu0 0.0
    %714 = vmatpush2.msra.mxu0 0.0
    %715 = vmatprep.subr.mxu0 0.0
    %716 = vmatpush2.msra.mxu0 0.0
    %717 = vmatprep.subr.mxu0 0.0
    %718 = vmatpush2.msra.mxu0 0.0
    %719 = vmatprep.subr.mxu0 0.0
    %720 = vmatpush2.msra.mxu0 0.0
    %721 = vmatprep.subr.mxu0 0.0
    %722 = vmatpush2.msra.mxu0 0.0
    %723 = vmatprep.subr.mxu0 0.0
    %724 = vmatpush2.msra.mxu0 0.0
    %725 = vmatprep.subr.mxu0 0.0
    %726 = vmatpush2.msra.mxu0 0.0
    %727 = vmatprep.subr.mxu0 0.0
    %728 = vmatpush2.msra.mxu0 0.0
    %729 = vmatprep.subr.mxu0 0.0
    %730 = vmatpush2.msra.mxu0 0.0
    %731 = vmatprep.subr.mxu0 0.0
    %732 = vmatpush2.msra.mxu0 0.0
    %733 = vmatprep.subr.mxu0 0.0
    %734 = vmatpush2.msra.mxu0 0.0
    %735 = vmatprep.subr.mxu0 0.0
    %736 = vmatpush2.msra.mxu0 0.0
    %737 = vmatprep.subr.mxu0 0.0
    %738 = vmatpush2.msra.mxu0 0.0
    %739 = vmatprep.subr.mxu0 0.0
    %740 = vmatpush2.msra.mxu0 0.0
    %741 = vmatprep.subr.mxu0 0.0
    %742 = vmatpush2.msra.mxu0 0.0
    %743 = vmatprep.mubr.f32.mxu0 0.0
    %744 = vmatmul.mubr.f32.gmra.mxu0 %v443
    %v745 = vpop.f32.mrf.mxu0
    %v746 = vadd.f32 %v669, %v745
    %v747 = vpop.f32.mrf.mxu0
    %v748 = vadd.f32 %v671, %v747
    %749 = vmatprep.mubr.f32.mxu0 0.0
    %750 = vmatmul.mubr.f32.gmra.mxu0 %v446
    %v751 = vpop.f32.mrf.mxu0
    %v752 = vadd.f32 %v675, %v751
    %v753 = vpop.f32.mrf.mxu0
    %v754 = vadd.f32 %v677, %v753
    %755 = vdwg.mxu0
    %756 = vmatprep.subr.mxu0 0.0
    %757 = vmatpush1.msra.mxu0 %v177
    %758 = vmatprep.subr.mxu0 0.0
    %759 = vmatpush1.msra.mxu0 %v174
    %760 = vmatprep.subr.mxu0 0.0
    %761 = vmatpush1.msra.mxu0 %v171
    %762 = vmatprep.subr.mxu0 0.0
    %763 = vmatpush1.msra.mxu0 %v168
    %764 = vmatprep.subr.mxu0 0.0
    %765 = vmatpush1.msra.mxu0 %v165
    %766 = vmatprep.subr.mxu0 0.0
    %767 = vmatpush1.msra.mxu0 %v162
    %768 = vmatprep.subr.mxu0 0.0
    %769 = vmatpush1.msra.mxu0 %v159
    %770 = vmatprep.subr.mxu0 0.0
    %771 = vmatpush1.msra.mxu0 %v156
    %772 = vmatprep.subr.mxu0 0.0
    %773 = vmatpush1.msra.mxu0 %v153
    %774 = vmatprep.subr.mxu0 0.0
    %775 = vmatpush1.msra.mxu0 %v150
    %776 = vmatprep.subr.mxu0 0.0
    %777 = vmatpush1.msra.mxu0 %v147
    %778 = vmatprep.subr.mxu0 0.0
    %779 = vmatpush1.msra.mxu0 %v144
    %780 = vmatprep.subr.mxu0 0.0
    %781 = vmatpush1.msra.mxu0 %v141
    %782 = vmatprep.subr.mxu0 0.0
    %783 = vmatpush1.msra.mxu0 %v138
    %784 = vmatprep.subr.mxu0 0.0
    %785 = vmatpush1.msra.mxu0 %v135
    %786 = vmatprep.subr.mxu0 0.0
    %787 = vmatpush1.msra.mxu0 %v132
    %788 = vmatprep.subr.mxu0 0.0
    %789 = vmatpush2.msra.mxu0 %v225
    %790 = vmatprep.subr.mxu0 0.0
    %791 = vmatpush2.msra.mxu0 %v222
    %792 = vmatprep.subr.mxu0 0.0
    %793 = vmatpush2.msra.mxu0 %v219
    %794 = vmatprep.subr.mxu0 0.0
    %795 = vmatpush2.msra.mxu0 %v216
    %796 = vmatprep.subr.mxu0 0.0
    %797 = vmatpush2.msra.mxu0 %v213
    %798 = vmatprep.subr.mxu0 0.0
    %799 = vmatpush2.msra.mxu0 %v210
    %800 = vmatprep.subr.mxu0 0.0
    %801 = vmatpush2.msra.mxu0 %v207
    %802 = vmatprep.subr.mxu0 0.0
    %803 = vmatpush2.msra.mxu0 %v204
    %804 = vmatprep.subr.mxu0 0.0
    %805 = vmatpush2.msra.mxu0 %v201
    %806 = vmatprep.subr.mxu0 0.0
    %807 = vmatpush2.msra.mxu0 %v198
    %808 = vmatprep.subr.mxu0 0.0
    %809 = vmatpush2.msra.mxu0 %v195
    %810 = vmatprep.subr.mxu0 0.0
    %811 = vmatpush2.msra.mxu0 %v192
    %812 = vmatprep.subr.mxu0 0.0
    %813 = vmatpush2.msra.mxu0 %v189
    %814 = vmatprep.subr.mxu0 0.0
    %815 = vmatpush2.msra.mxu0 %v186
    %816 = vmatprep.subr.mxu0 0.0
    %817 = vmatpush2.msra.mxu0 %v183
    %818 = vmatprep.subr.mxu0 0.0
    %819 = vmatpush2.msra.mxu0 %v180
    %820 = vmatprep.mubr.f32.mxu0 %v117
    %821 = vmatmul.mubr.f32.gmra.mxu0 %v116
    %v822 = vpop.f32.mrf.mxu0
    %v823 = vadd.f32 %v437, %v822
    %v824 = vpop.f32.mrf.mxu0
    %825 = vmatprep.mubr.f32.mxu0 %v124
    %826 = vmatmul.mubr.f32.gmra.mxu0 %v123
    %v827 = vpop.f32.mrf.mxu0
    %v828 = vadd.f32 %v437, %v827
    %v829 = vpop.f32.mrf.mxu0
    %830 = vdwg.mxu0
    %831 = vmatprep.subr.mxu0 0.0
    %832 = vmatpush1.msra.mxu0 %v273
    %833 = vmatprep.subr.mxu0 0.0
    %834 = vmatpush1.msra.mxu0 %v270
    %835 = vmatprep.subr.mxu0 0.0
    %836 = vmatpush1.msra.mxu0 %v267
    %837 = vmatprep.subr.mxu0 0.0
    %838 = vmatpush1.msra.mxu0 %v264
    %839 = vmatprep.subr.mxu0 0.0
    %840 = vmatpush1.msra.mxu0 %v261
    %841 = vmatprep.subr.mxu0 0.0
    %842 = vmatpush1.msra.mxu0 %v258
    %843 = vmatprep.subr.mxu0 0.0
    %844 = vmatpush1.msra.mxu0 %v255
    %845 = vmatprep.subr.mxu0 0.0
    %846 = vmatpush1.msra.mxu0 %v252
    %847 = vmatprep.subr.mxu0 0.0
    %848 = vmatpush1.msra.mxu0 %v249
    %849 = vmatprep.subr.mxu0 0.0
    %850 = vmatpush1.msra.mxu0 %v246
    %851 = vmatprep.subr.mxu0 0.0
    %852 = vmatpush1.msra.mxu0 %v243
    %853 = vmatprep.subr.mxu0 0.0
    %854 = vmatpush1.msra.mxu0 %v240
    %855 = vmatprep.subr.mxu0 0.0
    %856 = vmatpush1.msra.mxu0 %v237
    %857 = vmatprep.subr.mxu0 0.0
    %858 = vmatpush1.msra.mxu0 %v234
    %859 = vmatprep.subr.mxu0 0.0
    %860 = vmatpush1.msra.mxu0 %v231
    %861 = vmatprep.subr.mxu0 0.0
    %862 = vmatpush1.msra.mxu0 %v228
    %863 = vmatprep.subr.mxu0 0.0
    %864 = vmatpush2.msra.mxu0 %v321
    %865 = vmatprep.subr.mxu0 0.0
    %866 = vmatpush2.msra.mxu0 %v318
    %867 = vmatprep.subr.mxu0 0.0
    %868 = vmatpush2.msra.mxu0 %v315
    %869 = vmatprep.subr.mxu0 0.0
    %870 = vmatpush2.msra.mxu0 %v312
    %871 = vmatprep.subr.mxu0 0.0
    %872 = vmatpush2.msra.mxu0 %v309
    %873 = vmatprep.subr.mxu0 0.0
    %874 = vmatpush2.msra.mxu0 %v306
    %875 = vmatprep.subr.mxu0 0.0
    %876 = vmatpush2.msra.mxu0 %v303
    %877 = vmatprep.subr.mxu0 0.0
    %878 = vmatpush2.msra.mxu0 %v300
    %879 = vmatprep.subr.mxu0 0.0
    %880 = vmatpush2.msra.mxu0 %v297
    %881 = vmatprep.subr.mxu0 0.0
    %882 = vmatpush2.msra.mxu0 %v294
    %883 = vmatprep.subr.mxu0 0.0
    %884 = vmatpush2.msra.mxu0 %v291
    %885 = vmatprep.subr.mxu0 0.0
    %886 = vmatpush2.msra.mxu0 %v288
    %887 = vmatprep.subr.mxu0 0.0
    %888 = vmatpush2.msra.mxu0 %v285
    %889 = vmatprep.subr.mxu0 0.0
    %890 = vmatpush2.msra.mxu0 %v282
    %891 = vmatprep.subr.mxu0 0.0
    %892 = vmatpush2.msra.mxu0 %v279
    %893 = vmatprep.subr.mxu0 0.0
    %894 = vmatpush2.msra.mxu0 %v276
    %895 = vmatprep.mubr.f32.mxu0 %v119
    %896 = vmatmul.mubr.f32.gmra.mxu0 %v118
    %v897 = vpop.f32.mrf.mxu0
    %v898 = vadd.f32 %v823, %v897
    %v899 = vpop.f32.mrf.mxu0
    %900 = vmatprep.mubr.f32.mxu0 %v126
    %901 = vmatmul.mubr.f32.gmra.mxu0 %v125
    %v902 = vpop.f32.mrf.mxu0
    %v903 = vadd.f32 %v828, %v902
    %v904 = vpop.f32.mrf.mxu0
    %905 = vdwg.mxu0
    %906 = vmatprep.subr.mxu0 0.0
    %907 = vmatpush1.msra.mxu0 %v369
    %908 = vmatprep.subr.mxu0 0.0
    %909 = vmatpush1.msra.mxu0 %v366
    %910 = vmatprep.subr.mxu0 0.0
    %911 = vmatpush1.msra.mxu0 %v363
    %912 = vmatprep.subr.mxu0 0.0
    %913 = vmatpush1.msra.mxu0 %v360
    %914 = vmatprep.subr.mxu0 0.0
    %915 = vmatpush1.msra.mxu0 %v357
    %916 = vmatprep.subr.mxu0 0.0
    %917 = vmatpush1.msra.mxu0 %v354
    %918 = vmatprep.subr.mxu0 0.0
    %919 = vmatpush1.msra.mxu0 %v351
    %920 = vmatprep.subr.mxu0 0.0
    %921 = vmatpush1.msra.mxu0 %v348
    %922 = vmatprep.subr.mxu0 0.0
    %923 = vmatpush1.msra.mxu0 %v345
    %924 = vmatprep.subr.mxu0 0.0
    %925 = vmatpush1.msra.mxu0 %v342
    %926 = vmatprep.subr.mxu0 0.0
    %927 = vmatpush1.msra.mxu0 %v339
    %928 = vmatprep.subr.mxu0 0.0
    %929 = vmatpush1.msra.mxu0 %v336
    %930 = vmatprep.subr.mxu0 0.0
    %931 = vmatpush1.msra.mxu0 %v333
    %932 = vmatprep.subr.mxu0 0.0
    %933 = vmatpush1.msra.mxu0 %v330
    %934 = vmatprep.subr.mxu0 0.0
    %935 = vmatpush1.msra.mxu0 %v327
    %936 = vmatprep.subr.mxu0 0.0
    %937 = vmatpush1.msra.mxu0 %v324
    %938 = vmatprep.subr.mxu0 0.0
    %939 = vmatpush2.msra.mxu0 %v417
    %940 = vmatprep.subr.mxu0 0.0
    %941 = vmatpush2.msra.mxu0 %v414
    %942 = vmatprep.subr.mxu0 0.0
    %943 = vmatpush2.msra.mxu0 %v411
    %944 = vmatprep.subr.mxu0 0.0
    %945 = vmatpush2.msra.mxu0 %v408
    %946 = vmatprep.subr.mxu0 0.0
    %947 = vmatpush2.msra.mxu0 %v405
    %948 = vmatprep.subr.mxu0 0.0
    %949 = vmatpush2.msra.mxu0 %v402
    %950 = vmatprep.subr.mxu0 0.0
    %951 = vmatpush2.msra.mxu0 %v399
    %952 = vmatprep.subr.mxu0 0.0
    %953 = vmatpush2.msra.mxu0 %v396
    %954 = vmatprep.subr.mxu0 0.0
    %955 = vmatpush2.msra.mxu0 %v393
    %956 = vmatprep.subr.mxu0 0.0
    %957 = vmatpush2.msra.mxu0 %v390
    %958 = vmatprep.subr.mxu0 0.0
    %959 = vmatpush2.msra.mxu0 %v387
    %960 = vmatprep.subr.mxu0 0.0
    %961 = vmatpush2.msra.mxu0 %v384
    %962 = vmatprep.subr.mxu0 0.0
    %963 = vmatpush2.msra.mxu0 %v381
    %964 = vmatprep.subr.mxu0 0.0
    %965 = vmatpush2.msra.mxu0 %v378
    %966 = vmatprep.subr.mxu0 0.0
    %967 = vmatpush2.msra.mxu0 %v375
    %968 = vmatprep.subr.mxu0 0.0
    %969 = vmatpush2.msra.mxu0 %v372
    %970 = vmatprep.mubr.f32.mxu0 %v121
    %971 = vmatmul.mubr.f32.gmra.mxu0 %v120
    %v972 = vpop.f32.mrf.mxu0
    %v973 = vadd.f32 %v898, %v972
    %v974 = vpop.f32.mrf.mxu0
    %975 = vmatprep.mubr.f32.mxu0 %v128
    %976 = vmatmul.mubr.f32.gmra.mxu0 %v127
    %v977 = vpop.f32.mrf.mxu0
    %v978 = vadd.f32 %v903, %v977
    %v979 = vpop.f32.mrf.mxu0
    %980 = vdwg.mxu0
    %981 = vmatprep.subr.mxu0 0.0
    %982 = vmatpush1.msra.mxu0 0.0
    %983 = vmatprep.subr.mxu0 0.0
    %984 = vmatpush1.msra.mxu0 0.0
    %985 = vmatprep.subr.mxu0 0.0
    %986 = vmatpush1.msra.mxu0 0.0
    %987 = vmatprep.subr.mxu0 0.0
    %988 = vmatpush1.msra.mxu0 0.0
    %989 = vmatprep.subr.mxu0 0.0
    %990 = vmatpush1.msra.mxu0 0.0
    %991 = vmatprep.subr.mxu0 0.0
    %992 = vmatpush1.msra.mxu0 0.0
    %993 = vmatprep.subr.mxu0 0.0
    %994 = vmatpush1.msra.mxu0 0.0
    %995 = vmatprep.subr.mxu0 0.0
    %996 = vmatpush1.msra.mxu0 0.0
    %997 = vmatprep.subr.mxu0 0.0
    %998 = vmatpush1.msra.mxu0 0.0
    %999 = vmatprep.subr.mxu0 0.0
    %1000 = vmatpush1.msra.mxu0 0.0
    %1001 = vmatprep.subr.mxu0 0.0
    %1002 = vmatpush1.msra.mxu0 0.0
    %1003 = vmatprep.subr.mxu0 0.0
    %1004 = vmatpush1.msra.mxu0 0.0
    %1005 = vmatprep.subr.mxu0 0.0
    %1006 = vmatpush1.msra.mxu0 0.0
    %1007 = vmatprep.subr.mxu0 0.0
    %1008 = vmatpush1.msra.mxu0 0.0
    %1009 = vmatprep.subr.mxu0 0.0
    %1010 = vmatpush1.msra.mxu0 %v423
    %1011 = vmatprep.subr.mxu0 0.0
    %1012 = vmatpush1.msra.mxu0 %v420
    %1013 = vmatprep.subr.mxu0 0.0
    %1014 = vmatpush2.msra.mxu0 0.0
    %1015 = vmatprep.subr.mxu0 0.0
    %1016 = vmatpush2.msra.mxu0 0.0
    %1017 = vmatprep.subr.mxu0 0.0
    %1018 = vmatpush2.msra.mxu0 0.0
    %1019 = vmatprep.subr.mxu0 0.0
    %1020 = vmatpush2.msra.mxu0 0.0
    %1021 = vmatprep.subr.mxu0 0.0
    %1022 = vmatpush2.msra.mxu0 0.0
    %1023 = vmatprep.subr.mxu0 0.0
    %1024 = vmatpush2.msra.mxu0 0.0
    %1025 = vmatprep.subr.mxu0 0.0
    %1026 = vmatpush2.msra.mxu0 0.0
    %1027 = vmatprep.subr.mxu0 0.0
    %1028 = vmatpush2.msra.mxu0 0.0
    %1029 = vmatprep.subr.mxu0 0.0
    %1030 = vmatpush2.msra.mxu0 0.0
    %1031 = vmatprep.subr.mxu0 0.0
    %1032 = vmatpush2.msra.mxu0 0.0
    %1033 = vmatprep.subr.mxu0 0.0
    %1034 = vmatpush2.msra.mxu0 0.0
    %1035 = vmatprep.subr.mxu0 0.0
    %1036 = vmatpush2.msra.mxu0 0.0
    %1037 = vmatprep.subr.mxu0 0.0
    %1038 = vmatpush2.msra.mxu0 0.0
    %1039 = vmatprep.subr.mxu0 0.0
    %1040 = vmatpush2.msra.mxu0 0.0
    %1041 = vmatprep.subr.mxu0 0.0
    %1042 = vmatpush2.msra.mxu0 0.0
    %1043 = vmatprep.subr.mxu0 0.0
    %1044 = vmatpush2.msra.mxu0 0.0
    %1045 = vmatprep.mubr.f32.mxu0 0.0
    %1046 = vmatmul.mubr.f32.gmra.mxu0 %v443
    %v1047 = vpop.f32.mrf.mxu0
    %v1048 = vadd.f32 %v973, %v1047
    %v1049 = vpop.f32.mrf.mxu0
    %1050 = vmatprep.mubr.f32.mxu0 0.0
    %1051 = vmatmul.mubr.f32.gmra.mxu0 %v446
    %v1052 = vpop.f32.mrf.mxu0
    %v1053 = vadd.f32 %v978, %v1052
    %v1054 = vpop.f32.mrf.mxu0
    %1055 = vdwg.mxu0
    %v1056 = vmax.f32 %v746, 0.0
    %v1057 = vmax.f32 %v748, 0.0
    %v1058 = vmax.f32 %v1048, 0.0
    %v1059 = vmax.f32 %v752, 0.0
    %v1060 = vmax.f32 %v754, 0.0
    %v1061 = vmax.f32 %v1053, 0.0
    %v1062 = vld [vmem:[#allocation8] sm:$0xff]
    %v1063 = vld [vmem:[#allocation8 + $0x8] sm:$0xff]
    %v1064 = vld [vmem:[#allocation8 + $0x10] sm:$0xff]
    %v1065 = vld [vmem:[#allocation8 + $0x18] sm:$0xff]
    %v1066 = vld [vmem:[#allocation8 + $0x20] sm:$0xff]
    %v1067 = vld [vmem:[#allocation8 + $0x28] sm:$0xff]
    %v1068 = vld [vmem:[#allocation8 + $0x30] sm:$0xff]
    %v1069 = vld [vmem:[#allocation8 + $0x38] sm:$0xff]
    %v1070 = vld [vmem:[#allocation8 + $0x40] sm:$0xff]
    %v1071 = vld [vmem:[#allocation8 + $0x48] sm:$0xff]
    %v1072 = vld [vmem:[#allocation8 + $0x50] sm:$0xff]
    %v1073 = vld [vmem:[#allocation8 + $0x58] sm:$0xff]
    %v1074 = vld [vmem:[#allocation8 + $0x60] sm:$0xff]
    %v1075 = vld [vmem:[#allocation8 + $0x68] sm:$0xff]
    %v1076 = vld [vmem:[#allocation8 + $0x70] sm:$0xff]
    %v1077 = vld [vmem:[#allocation8 + $0x78] sm:$0xff]
    %v1078 = vld [vmem:[#allocation8 + $0x80] sm:$0xff]
    %v1079 = vld [vmem:[#allocation8 + $0x88] sm:$0xff]
    %v1080 = vld [vmem:[#allocation8 + $0x90] sm:$0xff]
    %v1081 = vld [vmem:[#allocation8 + $0x98] sm:$0xff]
    %v1082 = vld [vmem:[#allocation8 + $0xa0] sm:$0xff]
    %v1083 = vld [vmem:[#allocation8 + $0xa8] sm:$0xff]
    %v1084 = vld [vmem:[#allocation8 + $0xb0] sm:$0xff]
    %v1085 = vld [vmem:[#allocation8 + $0xb8] sm:$0xff]
    %v1086 = vld [vmem:[#allocation8 + $0xc0] sm:$0xff]
    %v1087 = vld [vmem:[#allocation8 + $0xc8] sm:$0xff]
    %v1088 = vld [vmem:[#allocation8 + $0xd0] sm:$0xff]
    %v1089 = vld [vmem:[#allocation8 + $0xd8] sm:$0xff]
    %v1090 = vld [vmem:[#allocation8 + $0xe0] sm:$0xff]
    %v1091 = vld [vmem:[#allocation8 + $0xe8] sm:$0xff]
    %v1092 = vld [vmem:[#allocation8 + $0xf0] sm:$0xff]
    %v1093 = vld [vmem:[#allocation8 + $0xf8] sm:$0xff]
    %v1094 = vld [vmem:[#allocation8 + $0x100] sm:$0xff]
    %v1095 = vld [vmem:[#allocation8 + $0x108] sm:$0xff]
    %v1096 = vld [vmem:[#allocation8 + $0x110] sm:$0xff]
    %v1097 = vld [vmem:[#allocation8 + $0x118] sm:$0xff]
    %v1098 = vld [vmem:[#allocation8 + $0x120] sm:$0xff]
    %v1099 = vld [vmem:[#allocation8 + $0x128] sm:$0xff]
    %v1100 = vld [vmem:[#allocation8 + $0x130] sm:$0xff]
    %v1101 = vld [vmem:[#allocation8 + $0x138] sm:$0xff]
    %v1102 = vld [vmem:[#allocation8 + $0x140] sm:$0xff]
    %v1103 = vld [vmem:[#allocation8 + $0x148] sm:$0xff]
    %v1104 = vld [vmem:[#allocation8 + $0x150] sm:$0xff]
    %v1105 = vld [vmem:[#allocation8 + $0x158] sm:$0xff]
    %v1106 = vld [vmem:[#allocation8 + $0x160] sm:$0xff]
    %v1107 = vld [vmem:[#allocation8 + $0x168] sm:$0xff]
    %v1108 = vld [vmem:[#allocation8 + $0x170] sm:$0xff]
    %v1109 = vld [vmem:[#allocation8 + $0x178] sm:$0xff]
    %v1110 = vld [vmem:[#allocation10] sm:$0x1]
    %v1112 = vlaneseq
    %v1113 = vshrl.u32 %v1112, 7
    %v1114 = vsub.s32 0, %v1113
    %v1115 = vrot.slane %v1110, %v1114
    %1117 = vmatprep.subr.mxu0 0.0
    %1118 = vmatpush1.msra.mxu0 %v1077
    %1119 = vmatprep.subr.mxu0 0.0
    %1120 = vmatpush1.msra.mxu0 %v1076
    %1121 = vmatprep.subr.mxu0 0.0
    %1122 = vmatpush1.msra.mxu0 %v1075
    %1123 = vmatprep.subr.mxu0 0.0
    %1124 = vmatpush1.msra.mxu0 %v1074
    %1125 = vmatprep.subr.mxu0 0.0
    %1126 = vmatpush1.msra.mxu0 %v1073
    %1127 = vmatprep.subr.mxu0 0.0
    %1128 = vmatpush1.msra.mxu0 %v1072
    %1129 = vmatprep.subr.mxu0 0.0
    %1130 = vmatpush1.msra.mxu0 %v1071
    %1131 = vmatprep.subr.mxu0 0.0
    %1132 = vmatpush1.msra.mxu0 %v1070
    %1133 = vmatprep.subr.mxu0 0.0
    %1134 = vmatpush1.msra.mxu0 %v1069
    %1135 = vmatprep.subr.mxu0 0.0
    %1136 = vmatpush1.msra.mxu0 %v1068
    %1137 = vmatprep.subr.mxu0 0.0
    %1138 = vmatpush1.msra.mxu0 %v1067
    %1139 = vmatprep.subr.mxu0 0.0
    %1140 = vmatpush1.msra.mxu0 %v1066
    %1141 = vmatprep.subr.mxu0 0.0
    %1142 = vmatpush1.msra.mxu0 %v1065
    %1143 = vmatprep.subr.mxu0 0.0
    %1144 = vmatpush1.msra.mxu0 %v1064
    %1145 = vmatprep.subr.mxu0 0.0
    %1146 = vmatpush1.msra.mxu0 %v1063
    %1147 = vmatprep.subr.mxu0 0.0
    %1148 = vmatpush1.msra.mxu0 %v1062
    %1149 = vmatprep.subr.mxu0 0.0
    %1150 = vmatpush2.msra.mxu0 %v1093
    %1151 = vmatprep.subr.mxu0 0.0
    %1152 = vmatpush2.msra.mxu0 %v1092
    %1153 = vmatprep.subr.mxu0 0.0
    %1154 = vmatpush2.msra.mxu0 %v1091
    %1155 = vmatprep.subr.mxu0 0.0
    %1156 = vmatpush2.msra.mxu0 %v1090
    %1157 = vmatprep.subr.mxu0 0.0
    %1158 = vmatpush2.msra.mxu0 %v1089
    %1159 = vmatprep.subr.mxu0 0.0
    %1160 = vmatpush2.msra.mxu0 %v1088
    %1161 = vmatprep.subr.mxu0 0.0
    %1162 = vmatpush2.msra.mxu0 %v1087
    %1163 = vmatprep.subr.mxu0 0.0
    %1164 = vmatpush2.msra.mxu0 %v1086
    %1165 = vmatprep.subr.mxu0 0.0
    %1166 = vmatpush2.msra.mxu0 %v1085
    %1167 = vmatprep.subr.mxu0 0.0
    %1168 = vmatpush2.msra.mxu0 %v1084
    %1169 = vmatprep.subr.mxu0 0.0
    %1170 = vmatpush2.msra.mxu0 %v1083
    %1171 = vmatprep.subr.mxu0 0.0
    %1172 = vmatpush2.msra.mxu0 %v1082
    %1173 = vmatprep.subr.mxu0 0.0
    %1174 = vmatpush2.msra.mxu0 %v1081
    %1175 = vmatprep.subr.mxu0 0.0
    %1176 = vmatpush2.msra.mxu0 %v1080
    %1177 = vmatprep.subr.mxu0 0.0
    %1178 = vmatpush2.msra.mxu0 %v1079
    %1179 = vmatprep.subr.mxu0 0.0
    %1180 = vmatpush2.msra.mxu0 %v1078
    %1181 = vmatprep.mubr.f32.mxu0 %v1057
    %1182 = vmatmul.mubr.f32.gmra.mxu0 %v1056
    %v1183 = vpop.f32.mrf.mxu0
    %v1184 = vadd.f32 %v1115, %v1183
    %v1185 = vpop.f32.mrf.mxu0
    %1186 = vmatprep.mubr.f32.mxu0 %v1060
    %1187 = vmatmul.mubr.f32.gmra.mxu0 %v1059
    %v1188 = vpop.f32.mrf.mxu0
    %v1189 = vadd.f32 %v1115, %v1188
    %v1190 = vpop.f32.mrf.mxu0
    %1191 = vdwg.mxu0
    %1192 = vmatprep.subr.mxu0 0.0
    %1193 = vmatpush1.msra.mxu0 %v1109
    %1194 = vmatprep.subr.mxu0 0.0
    %1195 = vmatpush1.msra.mxu0 %v1108
    %1196 = vmatprep.subr.mxu0 0.0
    %1197 = vmatpush1.msra.mxu0 %v1107
    %1198 = vmatprep.subr.mxu0 0.0
    %1199 = vmatpush1.msra.mxu0 %v1106
    %1200 = vmatprep.subr.mxu0 0.0
    %1201 = vmatpush1.msra.mxu0 %v1105
    %1202 = vmatprep.subr.mxu0 0.0
    %1203 = vmatpush1.msra.mxu0 %v1104
    %1204 = vmatprep.subr.mxu0 0.0
    %1205 = vmatpush1.msra.mxu0 %v1103
    %1206 = vmatprep.subr.mxu0 0.0
    %1207 = vmatpush1.msra.mxu0 %v1102
    %1208 = vmatprep.subr.mxu0 0.0
    %1209 = vmatpush1.msra.mxu0 %v1101
    %1210 = vmatprep.subr.mxu0 0.0
    %1211 = vmatpush1.msra.mxu0 %v1100
    %1212 = vmatprep.subr.mxu0 0.0
    %1213 = vmatpush1.msra.mxu0 %v1099
    %1214 = vmatprep.subr.mxu0 0.0
    %1215 = vmatpush1.msra.mxu0 %v1098
    %1216 = vmatprep.subr.mxu0 0.0
    %1217 = vmatpush1.msra.mxu0 %v1097
    %1218 = vmatprep.subr.mxu0 0.0
    %1219 = vmatpush1.msra.mxu0 %v1096
    %1220 = vmatprep.subr.mxu0 0.0
    %1221 = vmatpush1.msra.mxu0 %v1095
    %1222 = vmatprep.subr.mxu0 0.0
    %1223 = vmatpush1.msra.mxu0 %v1094
    %1224 = vmatprep.subr.mxu0 0.0
    %1225 = vmatpush2.msra.mxu0 0.0
    %1226 = vmatprep.subr.mxu0 0.0
    %1227 = vmatpush2.msra.mxu0 0.0
    %1228 = vmatprep.subr.mxu0 0.0
    %1229 = vmatpush2.msra.mxu0 0.0
    %1230 = vmatprep.subr.mxu0 0.0
    %1231 = vmatpush2.msra.mxu0 0.0
    %1232 = vmatprep.subr.mxu0 0.0
    %1233 = vmatpush2.msra.mxu0 0.0
    %1234 = vmatprep.subr.mxu0 0.0
    %1235 = vmatpush2.msra.mxu0 0.0
    %1236 = vmatprep.subr.mxu0 0.0
    %1237 = vmatpush2.msra.mxu0 0.0
    %1238 = vmatprep.subr.mxu0 0.0
    %1239 = vmatpush2.msra.mxu0 0.0
    %1240 = vmatprep.subr.mxu0 0.0
    %1241 = vmatpush2.msra.mxu0 0.0
    %1242 = vmatprep.subr.mxu0 0.0
    %1243 = vmatpush2.msra.mxu0 0.0
    %1244 = vmatprep.subr.mxu0 0.0
    %1245 = vmatpush2.msra.mxu0 0.0
    %1246 = vmatprep.subr.mxu0 0.0
    %1247 = vmatpush2.msra.mxu0 0.0
    %1248 = vmatprep.subr.mxu0 0.0
    %1249 = vmatpush2.msra.mxu0 0.0
    %1250 = vmatprep.subr.mxu0 0.0
    %1251 = vmatpush2.msra.mxu0 0.0
    %1252 = vmatprep.subr.mxu0 0.0
    %1253 = vmatpush2.msra.mxu0 0.0
    %1254 = vmatprep.subr.mxu0 0.0
    %1255 = vmatpush2.msra.mxu0 0.0
    %1256 = vmatprep.mubr.f32.mxu0 0.0
    %1257 = vmatmul.mubr.f32.gmra.mxu0 %v1058
    %v1258 = vpop.f32.mrf.mxu0
    %v1259 = vadd.f32 %v1184, %v1258
    %v1260 = vpop.f32.mrf.mxu0
    %1261 = vmatprep.mubr.f32.mxu0 0.0
    %1262 = vmatmul.mubr.f32.gmra.mxu0 %v1061
    %v1263 = vpop.f32.mrf.mxu0
    %v1264 = vadd.f32 %v1189, %v1263
    %v1265 = vpop.f32.mrf.mxu0
    %1266 = vdwg.mxu0
    %v1267 = vmax.f32 %v1259, 0.0
    %v1268 = vmax.f32 %v1264, 0.0
    %v1269 = vld [vmem:[#allocation11] sm:$0xff]
    %v1270 = vld [vmem:[#allocation11 + $0x8] sm:$0xff]
    %v1271 = vld [vmem:[#allocation11 + $0x10] sm:$0xff]
    %v1272 = vld [vmem:[#allocation11 + $0x18] sm:$0xff]
    %v1273 = vld [vmem:[#allocation11 + $0x20] sm:$0xff]
    %v1274 = vld [vmem:[#allocation11 + $0x28] sm:$0xff]
    %v1275 = vld [vmem:[#allocation11 + $0x30] sm:$0xff]
    %v1276 = vld [vmem:[#allocation11 + $0x38] sm:$0xff]
    %v1277 = vld [vmem:[#allocation11 + $0x40] sm:$0xff]
    %v1278 = vld [vmem:[#allocation11 + $0x48] sm:$0xff]
    %v1279 = vld [vmem:[#allocation11 + $0x50] sm:$0xff]
    %v1280 = vld [vmem:[#allocation11 + $0x58] sm:$0xff]
    %v1281 = vld [vmem:[#allocation11 + $0x60] sm:$0xff]
    %v1282 = vld [vmem:[#allocation11 + $0x68] sm:$0xff]
    %v1283 = vld [vmem:[#allocation11 + $0x70] sm:$0xff]
    %v1284 = vld [vmem:[#allocation11 + $0x78] sm:$0xff]
    %v1285 = vld [vmem:[#allocation13] sm:$0x1]
    %v1287 = vlaneseq
    %v1288 = vshrl.u32 %v1287, 7
    %v1289 = vsub.s32 0, %v1288
    %v1290 = vrot.slane %v1285, %v1289
    %1292 = vmatprep.subr.mxu0 0.0
    %1293 = vmatpush1.msra.mxu0 %v1284
    %1294 = vmatprep.subr.mxu0 0.0
    %1295 = vmatpush1.msra.mxu0 %v1283
    %1296 = vmatprep.subr.mxu0 0.0
    %1297 = vmatpush1.msra.mxu0 %v1282
    %1298 = vmatprep.subr.mxu0 0.0
    %1299 = vmatpush1.msra.mxu0 %v1281
    %1300 = vmatprep.subr.mxu0 0.0
    %1301 = vmatpush1.msra.mxu0 %v1280
    %1302 = vmatprep.subr.mxu0 0.0
    %1303 = vmatpush1.msra.mxu0 %v1279
    %1304 = vmatprep.subr.mxu0 0.0
    %1305 = vmatpush1.msra.mxu0 %v1278
    %1306 = vmatprep.subr.mxu0 0.0
    %1307 = vmatpush1.msra.mxu0 %v1277
    %1308 = vmatprep.subr.mxu0 0.0
    %1309 = vmatpush1.msra.mxu0 %v1276
    %1310 = vmatprep.subr.mxu0 0.0
    %1311 = vmatpush1.msra.mxu0 %v1275
    %1312 = vmatprep.subr.mxu0 0.0
    %1313 = vmatpush1.msra.mxu0 %v1274
    %1314 = vmatprep.subr.mxu0 0.0
    %1315 = vmatpush1.msra.mxu0 %v1273
    %1316 = vmatprep.subr.mxu0 0.0
    %1317 = vmatpush1.msra.mxu0 %v1272
    %1318 = vmatprep.subr.mxu0 0.0
    %1319 = vmatpush1.msra.mxu0 %v1271
    %1320 = vmatprep.subr.mxu0 0.0
    %1321 = vmatpush1.msra.mxu0 %v1270
    %1322 = vmatprep.subr.mxu0 0.0
    %1323 = vmatpush1.msra.mxu0 %v1269
    %1324 = vmatprep.subr.mxu0 0.0
    %1325 = vmatpush2.msra.mxu0 0.0
    %1326 = vmatprep.subr.mxu0 0.0
    %1327 = vmatpush2.msra.mxu0 0.0
    %1328 = vmatprep.subr.mxu0 0.0
    %1329 = vmatpush2.msra.mxu0 0.0
    %1330 = vmatprep.subr.mxu0 0.0
    %1331 = vmatpush2.msra.mxu0 0.0
    %1332 = vmatprep.subr.mxu0 0.0
    %1333 = vmatpush2.msra.mxu0 0.0
    %1334 = vmatprep.subr.mxu0 0.0
    %1335 = vmatpush2.msra.mxu0 0.0
    %1336 = vmatprep.subr.mxu0 0.0
    %1337 = vmatpush2.msra.mxu0 0.0
    %1338 = vmatprep.subr.mxu0 0.0
    %1339 = vmatpush2.msra.mxu0 0.0
    %1340 = vmatprep.subr.mxu0 0.0
    %1341 = vmatpush2.msra.mxu0 0.0
    %1342 = vmatprep.subr.mxu0 0.0
    %1343 = vmatpush2.msra.mxu0 0.0
    %1344 = vmatprep.subr.mxu0 0.0
    %1345 = vmatpush2.msra.mxu0 0.0
    %1346 = vmatprep.subr.mxu0 0.0
    %1347 = vmatpush2.msra.mxu0 0.0
    %1348 = vmatprep.subr.mxu0 0.0
    %1349 = vmatpush2.msra.mxu0 0.0
    %1350 = vmatprep.subr.mxu0 0.0
    %1351 = vmatpush2.msra.mxu0 0.0
    %1352 = vmatprep.subr.mxu0 0.0
    %1353 = vmatpush2.msra.mxu0 0.0
    %1354 = vmatprep.subr.mxu0 0.0
    %1355 = vmatpush2.msra.mxu0 0.0
    %1356 = vmatprep.mubr.f32.mxu0 0.0
    %1357 = vmatmul.mubr.f32.gmra.mxu0 %v1267
    %v1358 = vpop.f32.mrf.mxu0
    %v1359 = vadd.f32 %v1290, %v1358
    %v1360 = vpop.f32.mrf.mxu0
    %1361 = vmatprep.mubr.f32.mxu0 0.0
    %1362 = vmatmul.mubr.f32.gmra.mxu0 %v1268
    %v1363 = vpop.f32.mrf.mxu0
    %v1364 = vadd.f32 %v1290, %v1363
    %v1365 = vpop.f32.mrf.mxu0
    %1366 = vdwg.mxu0
    %v1367 = vlaneseq
    %v1368 = vand.u32 %v1367, 127
    %vm1369 = vcmp.lt.s32.totalorder %v1368, 10
    %v1370 = vsel %vm1369, %v1359, -1e+30
    %v1371 = vsel %vm1369, %v1364, -1e+30
    %1372 = vmax.xlane.f32.xlu0 %v1370
    %v1373 = vpop.xlane.xlu0 %1372
    %1374 = vmax.xlane.f32.xlu0 %v1371
    %v1375 = vpop.xlane.xlu0 %1374
    %v1376 = vsub.f32 %v1359, %v1373
    %v1377 = vsub.f32 %v1364, %v1375
    %v1378 = vmul.f32 %v1376, 1.442695
    %v1379 = vpow.pop %v1378
    %v1380 = vmul.f32 %v1377, 1.442695
    %v1381 = vpow.pop %v1380
    %v1382 = vsel %vm1369, %v1379, 0.0
    %v1383 = vsel %vm1369, %v1381, 0.0
    %1384 = vadd.xlane.f32.xlu0 %v1382
    %v1385 = vpop.xlane.xlu0 %1384
    %1386 = vadd.xlane.f32.xlu0 %v1383
    %v1387 = vpop.xlane.xlu0 %1386
    %v1388 = vlog2.pop %v1385
    %v1389 = vmul.f32 %v1388, 0.6931472
    %v1390 = vlog2.pop %v1387
    %v1391 = vmul.f32 %v1390, 0.6931472
    %v1392 = vadd.f32 %v1373, %v1389
    %v1393 = vadd.f32 %v1375, %v1391
    %v1394 = vsub.f32 %v1359, %v1392
    %v1395 = vsub.f32 %v1364, %v1393
    %1396 = vst [vmem:[#allocation14] sm:$0xff] %v1394
    %1397 = vst [vmem:[#allocation14 + $0x8] sm:$0xff] %v1395
    // Predicated region
    $region58: #{tpu_custom_call.1} parent=1 // pred_check
      _
    $region59: #{tpu_custom_call.1} parent=1 // pred_check_branch
      %1399 = sbr.rel (0) target = $region61
    $region60: #{tpu_custom_call.1} parent=1 // pred_region
      %s1401 = ssub.s32 256, 256
      %1402 = vsyncadd [#allocation4], %s1401
      %s1403 = sshll.u32 [#allocation14], 4
      %s1404 = int_to_ptr.vmem [resolvable:$true] %s1403
      %1409 = dma.vmem_to_hbm [thread:$0]  %s1404, 256, %s7, [#allocation4], 128, 128, 8
    $region61: #{tpu_custom_call.1} parent=1 // pred_fallthru
      _
    // Predicated region
    $region62: #{tpu_custom_call.1} parent=1 // pred_check
      _
    $region63: #{tpu_custom_call.1} parent=1 // pred_check_branch
      %1411 = sbr.rel (0) target = $region65
    $region64: #{tpu_custom_call.1} parent=1 // pred_region
      %1412 = dma.done [#allocation4], 256
    $region65: #{tpu_custom_call.1} parent=1 // pred_fallthru
      _
    %1413 = vsyncpa [#allocation3], 1
    %1414 = vsyncpa [#allocation6], 1
    %1415 = vsyncpa [#allocation9], 1
    %1416 = vsyncpa [#allocation12], 1
    %1417 = vsyncpa [#allocation4], 1

</llo_original>
